<compile_context>
chip_gen: v7x
topology: tpu7x:2x2x1
jax: 0.10.0
libtpu: 0.0.40
codegen_flags: <defaults>
</compile_context>

<pallas_src>
import math

import jax
import jax.numpy as jnp
from jax import lax
from jax.experimental import pallas as pl
from jax.experimental.pallas import tpu as pltpu

# ----- small Whisper-like dims -----
BATCH = 2
SEQ = 8
HIDDEN = 32               # embed_dim
NUM_HEADS = 4
HEAD_DIM = HIDDEN // NUM_HEADS
INTERMEDIATE = 4 * HIDDEN  # fc1 width
NORM_EPS = 1e-5            # nn.LayerNorm default (Whisper)


def _layer_norm(x, gamma, beta, eps):
    mu = jnp.mean(x, axis=-1, keepdims=True)
    var = jnp.mean(jnp.square(x - mu), axis=-1, keepdims=True)
    return (x - mu) * lax.rsqrt(var + eps) * gamma + beta


def _gelu_exact(x):
    # PyTorch default GELU (erf-based), matching use_gelu=True in the fused op.
    return 0.5 * x * (1.0 + lax.erf(x / math.sqrt(2.0)))


def whisper_layer_kernel(
    x_ref,     # (SEQ, HIDDEN)              one batch element (batch squeezed by BlockSpec)
    wq_ref,    # (NH, HIDDEN, HEAD_DIM)     bf16, head-major, pre-transposed, 1/sqrt(hd) folded
    wk_ref,    # (NH, HEAD_DIM, HIDDEN)     bf16, head-major, original (out,in) orientation
    wv_ref,    # (NH, HIDDEN, HEAD_DIM)     bf16, head-major, pre-transposed
    wo_ref,    # (NH, HEAD_DIM, HIDDEN)     bf16, out_proj^T split along its input (head) dim
    bqv_ref,   # (NH, 2, HEAD_DIM)          f32, [scaled q bias ; v bias] per head
    w1_ref,    # (HIDDEN, INTERMEDIATE)     bf16, pre-transposed fc1 weight
    w2_ref,    # (INTERMEDIATE, HIDDEN)     bf16, pre-transposed fc2 weight
    b1_ref,    # (1, INTERMEDIATE)          f32
    vecs_ref,  # (6, HIDDEN)                f32: [g1, beta1, g2, beta2, out_proj_bias, fc2_bias]
    out_ref,   # (SEQ, HIDDEN)
):
    x = x_ref[...].astype(jnp.float32)                     # (S, H)

    vecs = vecs_ref[...]
    g1, beta1 = vecs[0:1, :], vecs[1:2, :]
    g2, beta2 = vecs[2:3, :], vecs[3:4, :]
    bo, b2 = vecs[4:5, :], vecs[5:6, :]

    # ---------- self-attention block (pre-norm: LN -> MHA -> residual) ----------
    hn = _layer_norm(x, g1, beta1, NORM_EPS)               # f32
    hn_b = hn.astype(jnp.bfloat16)                         # bf16 operand for all projections

    def head_step(hh, attn_acc):
        bqv = bqv_ref[hh]                                  # (2, HD) f32
        bq, bv = bqv[0:1, :], bqv[1:2, :]

        # Q (already scaled via folded 1/sqrt(head_dim)) and V:  (S, HD), f32 accum.
        q = jnp.dot(hn_b, wq_ref[hh], preferred_element_type=jnp.float32) + bq
        v = jnp.dot(hn_b, wv_ref[hh], preferred_element_type=jnp.float32) + bv
        # K produced directly transposed (HD, S): contract hidden dim of Wk_h with hn,
        # so no in-kernel activation transpose is ever needed.
        kT = lax.dot_general(wk_ref[hh], hn_b, (((1,), (1,)), ((), ())),
                             preferred_element_type=jnp.float32)

        s = jnp.dot(q.astype(jnp.bfloat16), kT.astype(jnp.bfloat16),
                    preferred_element_type=jnp.float32)    # (S, S)
        s = s - jnp.max(s, axis=-1, keepdims=True)
        p = jnp.exp(s)
        p = p * pl.reciprocal(jnp.sum(p, axis=-1, keepdims=True), approx=True)

        ctx = jnp.dot(p.astype(jnp.bfloat16), v.astype(jnp.bfloat16),
                      preferred_element_type=jnp.float32)  # (S, HD)
        # Fold this head's context straight through its slice of out_proj^T:
        # no concat of heads, f32 accumulation across heads.
        return attn_acc + jnp.dot(ctx.astype(jnp.bfloat16), wo_ref[hh],
                                  preferred_element_type=jnp.float32)

    attn = lax.fori_loop(0, NUM_HEADS, head_step,
                         jnp.zeros((SEQ, HIDDEN), jnp.float32), unroll=True)
    x = x + attn + bo

    # ---------- feed-forward block (pre-norm: LN -> GELU MLP -> residual) ----------
    hn2 = _layer_norm(x, g2, beta2, NORM_EPS)
    f = jnp.dot(hn2.astype(jnp.bfloat16), w1_ref[...],
                preferred_element_type=jnp.float32) + b1_ref[...]
    f = _gelu_exact(f)
    f = jnp.dot(f.astype(jnp.bfloat16), w2_ref[...],
                preferred_element_type=jnp.float32) + b2
    out_ref[...] = (x + f).astype(out_ref.dtype)


def whisper_encoder_layer_forward(hidden_states, attention_mask, params):
    """hidden_states: (B, S, H) float32.  attention_mask is accepted but ignored,
    exactly like the BetterTransformer layer (it passes attention_mask=None)."""
    del attention_mask  # module sets attention_mask = None before the fused call
    B, S, H = hidden_states.shape
    NH, HD, I = NUM_HEADS, HEAD_DIM, INTERMEDIATE
    scale = 1.0 / math.sqrt(HD)

    # ---- host-side weight repack: head-major, pre-transposed, bf16, scale folded ----
    in_w = params["in_proj_weight"]                     # (3H, H)  [Wq; Wk; Wv]
    in_b = params["in_proj_bias"]                       # (3H,)    [bq; 0;  bv]
    wq = (in_w[0:H] * scale).reshape(NH, HD, H).transpose(0, 2, 1).astype(jnp.bfloat16)
    wk = in_w[H:2 * H].reshape(NH, HD, H).astype(jnp.bfloat16)
    wv = in_w[2 * H:3 * H].reshape(NH, HD, H).transpose(0, 2, 1).astype(jnp.bfloat16)
    wo = params["out_proj_weight"].T.reshape(NH, HD, H).astype(jnp.bfloat16)
    bqv = jnp.stack([(in_b[0:H] * scale).reshape(NH, HD),
                     in_b[2 * H:3 * H].reshape(NH, HD)], axis=1).astype(jnp.float32)
    w1 = params["linear1_weight"].T.astype(jnp.bfloat16)   # (H, I)
    w2 = params["linear2_weight"].T.astype(jnp.bfloat16)   # (I, H)
    b1 = params["linear1_bias"].reshape(1, I).astype(jnp.float32)
    vecs = jnp.stack([params["norm1_weight"], params["norm1_bias"],
                      params["norm2_weight"], params["norm2_bias"],
                      params["out_proj_bias"], params["linear2_bias"]],
                     axis=0).astype(jnp.float32)            # (6, H)

    args = (hidden_states, wq, wk, wv, wo, bqv, w1, w2, b1, vecs)

    def resident(a):  # full-extent, grid-invariant (weights / packed params)
        nd = a.ndim
        return pl.BlockSpec(a.shape, lambda b, _nd=nd: (0,) * _nd)

    in_specs = [pl.BlockSpec((None, S, H), lambda b: (b, 0, 0))] + \
               [resident(a) for a in args[1:]]
    out_spec = pl.BlockSpec((None, S, H), lambda b: (b, 0, 0))

    flops = B * (2 * S * H * 3 * H                 # q/k/v projections
                 + 2 * 2 * NH * S * S * HD         # scores + p@v
                 + 2 * S * H * H                   # out projection
                 + 2 * 2 * S * H * I)              # fc1 + fc2
    transcendentals = B * (NH * S * S + S * I)     # softmax exp + gelu erf
    bytes_accessed = sum(int(a.size) * a.dtype.itemsize for a in args) + B * S * H * 4

    fn = pl.pallas_call(
        whisper_layer_kernel,
        out_shape=jax.ShapeDtypeStruct((B, S, H), hidden_states.dtype),
        grid=(B,),                                  # batch on the grid: pipelined, and
        in_specs=in_specs,                          # shardable across v7x's 2 TCs
        out_specs=out_spec,
        compiler_params=pltpu.CompilerParams(
            dimension_semantics=("parallel",),
        ),
        cost_estimate=pl.CostEstimate(
            flops=int(flops),
            transcendentals=int(transcendentals),
            bytes_accessed=int(bytes_accessed),
        ),
    )
    return fn(*args)


# ---------------- pure-JAX reference (for correctness check) ----------------
def whisper_layer_reference(x, p):
    B, S, H = x.shape

    def ln(t, g, b, eps):
        mu = jnp.mean(t, -1, keepdims=True)
        var = jnp.mean((t - mu) ** 2, -1, keepdims=True)
        return (t - mu) / jnp.sqrt(var + eps) * g + b

    # pre-norm self-attention
    h = ln(x, p["norm1_weight"], p["norm1_bias"], NORM_EPS)
    qkv = jnp.einsum("bsh,oh->bso", h, p["in_proj_weight"]) + p["in_proj_bias"]
    q, k, v = jnp.split(qkv, 3, axis=-1)

    def split_heads(t):
        return t.reshape(B, S, NUM_HEADS, HEAD_DIM).transpose(0, 2, 1, 3)

    qh, kh, vh = split_heads(q), split_heads(k), split_heads(v)
    scores = jnp.einsum("bnqd,bnkd->bnqk", qh, kh) / math.sqrt(HEAD_DIM)
    probs = jax.nn.softmax(scores, axis=-1)
    ctx = jnp.einsum("bnqk,bnkd->bnqd", probs, vh).transpose(0, 2, 1, 3).reshape(B, S, H)
    attn = jnp.einsum("bsh,oh->bso", ctx, p["out_proj_weight"]) + p["out_proj_bias"]
    x = x + attn

    # pre-norm feed-forward
    h2 = ln(x, p["norm2_weight"], p["norm2_bias"], NORM_EPS)
    f = jnp.einsum("bsh,ih->bsi", h2, p["linear1_weight"]) + p["linear1_bias"]
    f = 0.5 * f * (1.0 + lax.erf(f / math.sqrt(2.0)))
    f = jnp.einsum("bsi,hi->bsh", f, p["linear2_weight"]) + p["linear2_bias"]
    return x + f


def init_params(key):
    ks = jax.random.split(key, 14)
    s = 0.05
    wq = s * jax.random.normal(ks[0], (HIDDEN, HIDDEN), jnp.float32)
    wk = s * jax.random.normal(ks[1], (HIDDEN, HIDDEN), jnp.float32)
    wv = s * jax.random.normal(ks[2], (HIDDEN, HIDDEN), jnp.float32)
    bq = s * jax.random.normal(ks[3], (HIDDEN,), jnp.float32)
    bv = s * jax.random.normal(ks[4], (HIDDEN,), jnp.float32)
    return {
        # in_proj = cat([Wq, Wk, Wv]); k-bias zeroed, exactly like the module's __init__
        "in_proj_weight": jnp.concatenate([wq, wk, wv], axis=0),
        "in_proj_bias": jnp.concatenate([bq, jnp.zeros_like(bq), bv], axis=0),
        "out_proj_weight": s * jax.random.normal(ks[5], (HIDDEN, HIDDEN), jnp.float32),
        "out_proj_bias": s * jax.random.normal(ks[6], (HIDDEN,), jnp.float32),
        "linear1_weight": s * jax.random.normal(ks[7], (INTERMEDIATE, HIDDEN), jnp.float32),
        "linear1_bias": s * jax.random.normal(ks[8], (INTERMEDIATE,), jnp.float32),
        "linear2_weight": s * jax.random.normal(ks[9], (HIDDEN, INTERMEDIATE), jnp.float32),
        "linear2_bias": s * jax.random.normal(ks[10], (HIDDEN,), jnp.float32),
        "norm1_weight": 1.0 + 0.1 * jax.random.normal(ks[11], (HIDDEN,), jnp.float32),
        "norm1_bias": 0.1 * jax.random.normal(ks[12], (HIDDEN,), jnp.float32),
        "norm2_weight": 1.0 + 0.1 * jax.random.normal(ks[13], (HIDDEN,), jnp.float32),
        "norm2_bias": jnp.zeros((HIDDEN,), jnp.float32),
    }


if __name__ == "__main__":
    key = jax.random.PRNGKey(0)
    kx, kp = jax.random.split(key)
    params = init_params(kp)

    hidden_states = jax.random.normal(kx, (BATCH, SEQ, HIDDEN), jnp.float32)

    # TODO(synk): torch nested-tensor handling (is_nested / to_padded_tensor) has no Pallas
    # equivalent; like the module's forward, the attention mask is dropped (None) so the
    # layer computes dense, unmasked self-attention.
    out = whisper_encoder_layer_forward(hidden_states, None, params)
    out = jax.block_until_ready(out)

    ref = whisper_layer_reference(hidden_states, params)
    assert out.shape == ref.shape
    max_err = float(jnp.max(jnp.abs(out - ref)))
    # tolerance accounts for bf16 matmul operands (f32 accumulation) and the
    # approximate softmax reciprocal; the fp32 reference is the PyTorch-equivalent math.
    assert jnp.allclose(out, ref, atol=5e-2, rtol=5e-2), f"mismatch vs reference: {max_err}"

    print("KERNEL_OK")
</pallas_src>

<mosaic_0001>
module attributes {stable_mosaic.version = 11 : i64} {
  func.func @whisper_layer_kernel(%arg0: i32, %arg1: memref<1x8x32xf32, #tpu.memory_space<vmem>>, %arg2: memref<4x32x8xbf16, #tpu.memory_space<vmem>>, %arg3: memref<4x8x32xbf16, #tpu.memory_space<vmem>>, %arg4: memref<4x32x8xbf16, #tpu.memory_space<vmem>>, %arg5: memref<4x8x32xbf16, #tpu.memory_space<vmem>>, %arg6: memref<4x2x8xf32, #tpu.memory_space<vmem>>, %arg7: memref<32x128xbf16, #tpu.memory_space<vmem>>, %arg8: memref<128x32xbf16, #tpu.memory_space<vmem>>, %arg9: memref<1x128xf32, #tpu.memory_space<vmem>>, %arg10: memref<6x32xf32, #tpu.memory_space<vmem>>, %arg11: memref<1x8x32xf32, #tpu.memory_space<vmem>>) attributes {dimension_semantics = [#tpu.dimension_semantics<parallel>], iteration_bounds = array<i64: 2>, scalar_prefetch = 0 : i64, scratch_operands = 0 : i64, tpu.core_type = #tpu.core_type<tc>, window_params = [{transform_indices = @transform_0, window_bounds = array<i64: 1, 8, 32>}, {pipeline_mode = #tpu.pipeline_mode<synchronous>, transform_indices = @transform_1, window_bounds = array<i64: 4, 32, 8>}, {pipeline_mode = #tpu.pipeline_mode<synchronous>, transform_indices = @transform_2, window_bounds = array<i64: 4, 8, 32>}, {pipeline_mode = #tpu.pipeline_mode<synchronous>, transform_indices = @transform_3, window_bounds = array<i64: 4, 32, 8>}, {pipeline_mode = #tpu.pipeline_mode<synchronous>, transform_indices = @transform_4, window_bounds = array<i64: 4, 8, 32>}, {pipeline_mode = #tpu.pipeline_mode<synchronous>, transform_indices = @transform_5, window_bounds = array<i64: 4, 2, 8>}, {pipeline_mode = #tpu.pipeline_mode<synchronous>, transform_indices = @transform_6, window_bounds = array<i64: 32, 128>}, {pipeline_mode = #tpu.pipeline_mode<synchronous>, transform_indices = @transform_7, window_bounds = array<i64: 128, 32>}, {pipeline_mode = #tpu.pipeline_mode<synchronous>, transform_indices = @transform_8, window_bounds = array<i64: 1, 128>}, {pipeline_mode = #tpu.pipeline_mode<synchronous>, transform_indices = @transform_9, window_bounds = array<i64: 6, 32>}, {transform_indices = @transform_10, window_bounds = array<i64: 1, 8, 32>}]} {
    %c0 = arith.constant 0 : index
    %c0_0 = arith.constant 0 : index
    %c0_1 = arith.constant 0 : index
    %0 = vector.load %arg1[%c0, %c0_0, %c0_1] : memref<1x8x32xf32, #tpu.memory_space<vmem>>, vector<1x8x32xf32>
    %1 = vector.shape_cast %0 : vector<1x8x32xf32> to vector<8x32xf32>
    %c0_2 = arith.constant 0 : index
    %c0_3 = arith.constant 0 : index
    %2 = vector.load %arg10[%c0_2, %c0_3] : memref<6x32xf32, #tpu.memory_space<vmem>>, vector<6x32xf32>
    %3 = vector.extract_strided_slice %2 {offsets = [0, 0], sizes = [1, 32], strides = [1, 1]} : vector<6x32xf32> to vector<1x32xf32>
    %4 = vector.extract_strided_slice %2 {offsets = [1, 0], sizes = [1, 32], strides = [1, 1]} : vector<6x32xf32> to vector<1x32xf32>
    %5 = vector.extract_strided_slice %2 {offsets = [2, 0], sizes = [1, 32], strides = [1, 1]} : vector<6x32xf32> to vector<1x32xf32>
    %6 = vector.extract_strided_slice %2 {offsets = [3, 0], sizes = [1, 32], strides = [1, 1]} : vector<6x32xf32> to vector<1x32xf32>
    %7 = vector.extract_strided_slice %2 {offsets = [4, 0], sizes = [1, 32], strides = [1, 1]} : vector<6x32xf32> to vector<1x32xf32>
    %8 = vector.extract_strided_slice %2 {offsets = [5, 0], sizes = [1, 32], strides = [1, 1]} : vector<6x32xf32> to vector<1x32xf32>
    %cst = arith.constant dense<0.000000e+00> : vector<8xf32>
    %9 = vector.multi_reduction <add>, %1, %cst [1] : vector<8x32xf32> to vector<8xf32>
    %10 = vector.shape_cast %9 : vector<8xf32> to vector<8x1xf32>
    %cst_4 = arith.constant 3.200000e+01 : f32
    %11 = vector.broadcast %cst_4 : f32 to vector<8x1xf32>
    %12 = arith.divf %10, %11 : vector<8x1xf32>
    %13 = vector.broadcast %12 : vector<8x1xf32> to vector<8x32xf32>
    %14 = arith.subf %1, %13 : vector<8x32xf32>
    %15 = arith.mulf %14, %14 : vector<8x32xf32>
    %cst_5 = arith.constant dense<0.000000e+00> : vector<8xf32>
    %16 = vector.multi_reduction <add>, %15, %cst_5 [1] : vector<8x32xf32> to vector<8xf32>
    %17 = vector.shape_cast %16 : vector<8xf32> to vector<8x1xf32>
    %cst_6 = arith.constant 3.200000e+01 : f32
    %18 = vector.broadcast %cst_6 : f32 to vector<8x1xf32>
    %19 = arith.divf %17, %18 : vector<8x1xf32>
    %20 = vector.broadcast %12 : vector<8x1xf32> to vector<8x32xf32>
    %21 = arith.subf %1, %20 : vector<8x32xf32>
    %cst_7 = arith.constant 9.99999974E-6 : f32
    %22 = vector.broadcast %cst_7 : f32 to vector<8x1xf32>
    %23 = arith.addf %19, %22 : vector<8x1xf32>
    %24 = math.rsqrt %23 : vector<8x1xf32>
    %25 = vector.broadcast %24 : vector<8x1xf32> to vector<8x32xf32>
    %26 = arith.mulf %21, %25 : vector<8x32xf32>
    %27 = vector.broadcast %3 : vector<1x32xf32> to vector<8x32xf32>
    %28 = arith.mulf %26, %27 : vector<8x32xf32>
    %29 = vector.broadcast %4 : vector<1x32xf32> to vector<8x32xf32>
    %30 = arith.addf %28, %29 : vector<8x32xf32>
    %31 = arith.truncf %30 : vector<8x32xf32> to vector<8x32xbf16>
    %cst_8 = arith.constant 0.000000e+00 : f32
    %32 = vector.broadcast %cst_8 : f32 to vector<8x32xf32>
    %c0_i32 = arith.constant 0 : i32
    %33 = arith.index_cast %c0_i32 : i32 to index
    %c0_9 = arith.constant 0 : index
    %c0_10 = arith.constant 0 : index
    %34 = vector.load %arg6[%33, %c0_9, %c0_10] : memref<4x2x8xf32, #tpu.memory_space<vmem>>, vector<1x2x8xf32>
    %35 = vector.shape_cast %34 : vector<1x2x8xf32> to vector<2x8xf32>
    %36 = vector.extract_strided_slice %35 {offsets = [0, 0], sizes = [1, 8], strides = [1, 1]} : vector<2x8xf32> to vector<1x8xf32>
    %37 = vector.extract_strided_slice %35 {offsets = [1, 0], sizes = [1, 8], strides = [1, 1]} : vector<2x8xf32> to vector<1x8xf32>
    %38 = arith.index_cast %c0_i32 : i32 to index
    %c0_11 = arith.constant 0 : index
    %c0_12 = arith.constant 0 : index
    %39 = vector.load %arg2[%38, %c0_11, %c0_12] : memref<4x32x8xbf16, #tpu.memory_space<vmem>>, vector<1x32x8xbf16>
    %40 = vector.shape_cast %39 : vector<1x32x8xbf16> to vector<32x8xbf16>
    %cst_13 = arith.constant dense<0.000000e+00> : vector<8x8xf32>
    %41 = tpu.matmul %31, %40, %cst_13 {dimension_numbers = #tpu.dot_dimension_numbers<[1], [0], [0], [1], [0, 0, 1, 1], [], []>} : vector<8x32xbf16>, vector<32x8xbf16>, vector<8x8xf32> -> vector<8x8xf32>
    %42 = vector.broadcast %36 : vector<1x8xf32> to vector<8x8xf32>
    %43 = arith.addf %41, %42 : vector<8x8xf32>
    %44 = arith.index_cast %c0_i32 : i32 to index
    %c0_14 = arith.constant 0 : index
    %c0_15 = arith.constant 0 : index
    %45 = vector.load %arg4[%44, %c0_14, %c0_15] : memref<4x32x8xbf16, #tpu.memory_space<vmem>>, vector<1x32x8xbf16>
    %46 = vector.shape_cast %45 : vector<1x32x8xbf16> to vector<32x8xbf16>
    %cst_16 = arith.constant dense<0.000000e+00> : vector<8x8xf32>
    %47 = tpu.matmul %31, %46, %cst_16 {dimension_numbers = #tpu.dot_dimension_numbers<[1], [0], [0], [1], [0, 0, 1, 1], [], []>} : vector<8x32xbf16>, vector<32x8xbf16>, vector<8x8xf32> -> vector<8x8xf32>
    %48 = vector.broadcast %37 : vector<1x8xf32> to vector<8x8xf32>
    %49 = arith.addf %47, %48 : vector<8x8xf32>
    %50 = arith.index_cast %c0_i32 : i32 to index
    %c0_17 = arith.constant 0 : index
    %c0_18 = arith.constant 0 : index
    %51 = vector.load %arg3[%50, %c0_17, %c0_18] : memref<4x8x32xbf16, #tpu.memory_space<vmem>>, vector<1x8x32xbf16>
    %52 = vector.shape_cast %51 : vector<1x8x32xbf16> to vector<8x32xbf16>
    %cst_19 = arith.constant dense<0.000000e+00> : vector<8x8xf32>
    %53 = tpu.matmul %52, %31, %cst_19 {dimension_numbers = #tpu.dot_dimension_numbers<[1], [1], [0], [0], [0, 0, 1, 0], [], []>} : vector<8x32xbf16>, vector<8x32xbf16>, vector<8x8xf32> -> vector<8x8xf32>
    %54 = arith.truncf %43 : vector<8x8xf32> to vector<8x8xbf16>
    %55 = arith.truncf %53 : vector<8x8xf32> to vector<8x8xbf16>
    %cst_20 = arith.constant dense<0.000000e+00> : vector<8x8xf32>
    %56 = tpu.matmul %54, %55, %cst_20 {dimension_numbers = #tpu.dot_dimension_numbers<[1], [0], [0], [1], [0, 0, 1, 1], [], []>} : vector<8x8xbf16>, vector<8x8xbf16>, vector<8x8xf32> -> vector<8x8xf32>
    %cst_21 = arith.constant dense<0xFF800000> : vector<8xf32>
    %57 = vector.multi_reduction <maximumf>, %56, %cst_21 [1] : vector<8x8xf32> to vector<8xf32>
    %58 = vector.shape_cast %57 : vector<8xf32> to vector<8x1xf32>
    %59 = vector.broadcast %58 : vector<8x1xf32> to vector<8x8xf32>
    %60 = arith.subf %56, %59 : vector<8x8xf32>
    %61 = math.exp %60 : vector<8x8xf32>
    %cst_22 = arith.constant dense<0.000000e+00> : vector<8xf32>
    %62 = vector.multi_reduction <add>, %61, %cst_22 [1] : vector<8x8xf32> to vector<8xf32>
    %63 = vector.shape_cast %62 : vector<8xf32> to vector<8x1xf32>
    %64 = tpu.reciprocal %63 {approx = true} : vector<8x1xf32> -> vector<8x1xf32>
    %65 = vector.broadcast %64 : vector<8x1xf32> to vector<8x8xf32>
    %66 = arith.mulf %61, %65 : vector<8x8xf32>
    %67 = arith.truncf %66 : vector<8x8xf32> to vector<8x8xbf16>
    %68 = arith.truncf %49 : vector<8x8xf32> to vector<8x8xbf16>
    %cst_23 = arith.constant dense<0.000000e+00> : vector<8x8xf32>
    %69 = tpu.matmul %67, %68, %cst_23 {dimension_numbers = #tpu.dot_dimension_numbers<[1], [0], [0], [1], [0, 0, 1, 1], [], []>} : vector<8x8xbf16>, vector<8x8xbf16>, vector<8x8xf32> -> vector<8x8xf32>
    %70 = arith.truncf %69 : vector<8x8xf32> to vector<8x8xbf16>
    %71 = arith.index_cast %c0_i32 : i32 to index
    %c0_24 = arith.constant 0 : index
    %c0_25 = arith.constant 0 : index
    %72 = vector.load %arg5[%71, %c0_24, %c0_25] : memref<4x8x32xbf16, #tpu.memory_space<vmem>>, vector<1x8x32xbf16>
    %73 = vector.shape_cast %72 : vector<1x8x32xbf16> to vector<8x32xbf16>
    %cst_26 = arith.constant dense<0.000000e+00> : vector<8x32xf32>
    %74 = tpu.matmul %70, %73, %cst_26 {dimension_numbers = #tpu.dot_dimension_numbers<[1], [0], [0], [1], [0, 0, 1, 1], [], []>} : vector<8x8xbf16>, vector<8x32xbf16>, vector<8x32xf32> -> vector<8x32xf32>
    %75 = arith.addf %32, %74 : vector<8x32xf32>
    %c1_i32 = arith.constant 1 : i32
    %76 = arith.index_cast %c1_i32 : i32 to index
    %c0_27 = arith.constant 0 : index
    %c0_28 = arith.constant 0 : index
    %77 = vector.load %arg6[%76, %c0_27, %c0_28] : memref<4x2x8xf32, #tpu.memory_space<vmem>>, vector<1x2x8xf32>
    %78 = vector.shape_cast %77 : vector<1x2x8xf32> to vector<2x8xf32>
    %79 = vector.extract_strided_slice %78 {offsets = [0, 0], sizes = [1, 8], strides = [1, 1]} : vector<2x8xf32> to vector<1x8xf32>
    %80 = vector.extract_strided_slice %78 {offsets = [1, 0], sizes = [1, 8], strides = [1, 1]} : vector<2x8xf32> to vector<1x8xf32>
    %81 = arith.index_cast %c1_i32 : i32 to index
    %c0_29 = arith.constant 0 : index
    %c0_30 = arith.constant 0 : index
    %82 = vector.load %arg2[%81, %c0_29, %c0_30] : memref<4x32x8xbf16, #tpu.memory_space<vmem>>, vector<1x32x8xbf16>
    %83 = vector.shape_cast %82 : vector<1x32x8xbf16> to vector<32x8xbf16>
    %cst_31 = arith.constant dense<0.000000e+00> : vector<8x8xf32>
    %84 = tpu.matmul %31, %83, %cst_31 {dimension_numbers = #tpu.dot_dimension_numbers<[1], [0], [0], [1], [0, 0, 1, 1], [], []>} : vector<8x32xbf16>, vector<32x8xbf16>, vector<8x8xf32> -> vector<8x8xf32>
    %85 = vector.broadcast %79 : vector<1x8xf32> to vector<8x8xf32>
    %86 = arith.addf %84, %85 : vector<8x8xf32>
    %87 = arith.index_cast %c1_i32 : i32 to index
    %c0_32 = arith.constant 0 : index
    %c0_33 = arith.constant 0 : index
    %88 = vector.load %arg4[%87, %c0_32, %c0_33] : memref<4x32x8xbf16, #tpu.memory_space<vmem>>, vector<1x32x8xbf16>
    %89 = vector.shape_cast %88 : vector<1x32x8xbf16> to vector<32x8xbf16>
    %cst_34 = arith.constant dense<0.000000e+00> : vector<8x8xf32>
    %90 = tpu.matmul %31, %89, %cst_34 {dimension_numbers = #tpu.dot_dimension_numbers<[1], [0], [0], [1], [0, 0, 1, 1], [], []>} : vector<8x32xbf16>, vector<32x8xbf16>, vector<8x8xf32> -> vector<8x8xf32>
    %91 = vector.broadcast %80 : vector<1x8xf32> to vector<8x8xf32>
    %92 = arith.addf %90, %91 : vector<8x8xf32>
    %93 = arith.index_cast %c1_i32 : i32 to index
    %c0_35 = arith.constant 0 : index
    %c0_36 = arith.constant 0 : index
    %94 = vector.load %arg3[%93, %c0_35, %c0_36] : memref<4x8x32xbf16, #tpu.memory_space<vmem>>, vector<1x8x32xbf16>
    %95 = vector.shape_cast %94 : vector<1x8x32xbf16> to vector<8x32xbf16>
    %cst_37 = arith.constant dense<0.000000e+00> : vector<8x8xf32>
    %96 = tpu.matmul %95, %31, %cst_37 {dimension_numbers = #tpu.dot_dimension_numbers<[1], [1], [0], [0], [0, 0, 1, 0], [], []>} : vector<8x32xbf16>, vector<8x32xbf16>, vector<8x8xf32> -> vector<8x8xf32>
    %97 = arith.truncf %86 : vector<8x8xf32> to vector<8x8xbf16>
    %98 = arith.truncf %96 : vector<8x8xf32> to vector<8x8xbf16>
    %cst_38 = arith.constant dense<0.000000e+00> : vector<8x8xf32>
    %99 = tpu.matmul %97, %98, %cst_38 {dimension_numbers = #tpu.dot_dimension_numbers<[1], [0], [0], [1], [0, 0, 1, 1], [], []>} : vector<8x8xbf16>, vector<8x8xbf16>, vector<8x8xf32> -> vector<8x8xf32>
    %cst_39 = arith.constant dense<0xFF800000> : vector<8xf32>
    %100 = vector.multi_reduction <maximumf>, %99, %cst_39 [1] : vector<8x8xf32> to vector<8xf32>
    %101 = vector.shape_cast %100 : vector<8xf32> to vector<8x1xf32>
    %102 = vector.broadcast %101 : vector<8x1xf32> to vector<8x8xf32>
    %103 = arith.subf %99, %102 : vector<8x8xf32>
    %104 = math.exp %103 : vector<8x8xf32>
    %cst_40 = arith.constant dense<0.000000e+00> : vector<8xf32>
    %105 = vector.multi_reduction <add>, %104, %cst_40 [1] : vector<8x8xf32> to vector<8xf32>
    %106 = vector.shape_cast %105 : vector<8xf32> to vector<8x1xf32>
    %107 = tpu.reciprocal %106 {approx = true} : vector<8x1xf32> -> vector<8x1xf32>
    %108 = vector.broadcast %107 : vector<8x1xf32> to vector<8x8xf32>
    %109 = arith.mulf %104, %108 : vector<8x8xf32>
    %110 = arith.truncf %109 : vector<8x8xf32> to vector<8x8xbf16>
    %111 = arith.truncf %92 : vector<8x8xf32> to vector<8x8xbf16>
    %cst_41 = arith.constant dense<0.000000e+00> : vector<8x8xf32>
    %112 = tpu.matmul %110, %111, %cst_41 {dimension_numbers = #tpu.dot_dimension_numbers<[1], [0], [0], [1], [0, 0, 1, 1], [], []>} : vector<8x8xbf16>, vector<8x8xbf16>, vector<8x8xf32> -> vector<8x8xf32>
    %113 = arith.truncf %112 : vector<8x8xf32> to vector<8x8xbf16>
    %114 = arith.index_cast %c1_i32 : i32 to index
    %c0_42 = arith.constant 0 : index
    %c0_43 = arith.constant 0 : index
    %115 = vector.load %arg5[%114, %c0_42, %c0_43] : memref<4x8x32xbf16, #tpu.memory_space<vmem>>, vector<1x8x32xbf16>
    %116 = vector.shape_cast %115 : vector<1x8x32xbf16> to vector<8x32xbf16>
    %cst_44 = arith.constant dense<0.000000e+00> : vector<8x32xf32>
    %117 = tpu.matmul %113, %116, %cst_44 {dimension_numbers = #tpu.dot_dimension_numbers<[1], [0], [0], [1], [0, 0, 1, 1], [], []>} : vector<8x8xbf16>, vector<8x32xbf16>, vector<8x32xf32> -> vector<8x32xf32>
    %118 = arith.addf %75, %117 : vector<8x32xf32>
    %c2_i32 = arith.constant 2 : i32
    %119 = arith.index_cast %c2_i32 : i32 to index
    %c0_45 = arith.constant 0 : index
    %c0_46 = arith.constant 0 : index
    %120 = vector.load %arg6[%119, %c0_45, %c0_46] : memref<4x2x8xf32, #tpu.memory_space<vmem>>, vector<1x2x8xf32>
    %121 = vector.shape_cast %120 : vector<1x2x8xf32> to vector<2x8xf32>
    %122 = vector.extract_strided_slice %121 {offsets = [0, 0], sizes = [1, 8], strides = [1, 1]} : vector<2x8xf32> to vector<1x8xf32>
    %123 = vector.extract_strided_slice %121 {offsets = [1, 0], sizes = [1, 8], strides = [1, 1]} : vector<2x8xf32> to vector<1x8xf32>
    %124 = arith.index_cast %c2_i32 : i32 to index
    %c0_47 = arith.constant 0 : index
    %c0_48 = arith.constant 0 : index
    %125 = vector.load %arg2[%124, %c0_47, %c0_48] : memref<4x32x8xbf16, #tpu.memory_space<vmem>>, vector<1x32x8xbf16>
    %126 = vector.shape_cast %125 : vector<1x32x8xbf16> to vector<32x8xbf16>
    %cst_49 = arith.constant dense<0.000000e+00> : vector<8x8xf32>
    %127 = tpu.matmul %31, %126, %cst_49 {dimension_numbers = #tpu.dot_dimension_numbers<[1], [0], [0], [1], [0, 0, 1, 1], [], []>} : vector<8x32xbf16>, vector<32x8xbf16>, vector<8x8xf32> -> vector<8x8xf32>
    %128 = vector.broadcast %122 : vector<1x8xf32> to vector<8x8xf32>
    %129 = arith.addf %127, %128 : vector<8x8xf32>
    %130 = arith.index_cast %c2_i32 : i32 to index
    %c0_50 = arith.constant 0 : index
    %c0_51 = arith.constant 0 : index
    %131 = vector.load %arg4[%130, %c0_50, %c0_51] : memref<4x32x8xbf16, #tpu.memory_space<vmem>>, vector<1x32x8xbf16>
    %132 = vector.shape_cast %131 : vector<1x32x8xbf16> to vector<32x8xbf16>
    %cst_52 = arith.constant dense<0.000000e+00> : vector<8x8xf32>
    %133 = tpu.matmul %31, %132, %cst_52 {dimension_numbers = #tpu.dot_dimension_numbers<[1], [0], [0], [1], [0, 0, 1, 1], [], []>} : vector<8x32xbf16>, vector<32x8xbf16>, vector<8x8xf32> -> vector<8x8xf32>
    %134 = vector.broadcast %123 : vector<1x8xf32> to vector<8x8xf32>
    %135 = arith.addf %133, %134 : vector<8x8xf32>
    %136 = arith.index_cast %c2_i32 : i32 to index
    %c0_53 = arith.constant 0 : index
    %c0_54 = arith.constant 0 : index
    %137 = vector.load %arg3[%136, %c0_53, %c0_54] : memref<4x8x32xbf16, #tpu.memory_space<vmem>>, vector<1x8x32xbf16>
    %138 = vector.shape_cast %137 : vector<1x8x32xbf16> to vector<8x32xbf16>
    %cst_55 = arith.constant dense<0.000000e+00> : vector<8x8xf32>
    %139 = tpu.matmul %138, %31, %cst_55 {dimension_numbers = #tpu.dot_dimension_numbers<[1], [1], [0], [0], [0, 0, 1, 0], [], []>} : vector<8x32xbf16>, vector<8x32xbf16>, vector<8x8xf32> -> vector<8x8xf32>
    %140 = arith.truncf %129 : vector<8x8xf32> to vector<8x8xbf16>
    %141 = arith.truncf %139 : vector<8x8xf32> to vector<8x8xbf16>
    %cst_56 = arith.constant dense<0.000000e+00> : vector<8x8xf32>
    %142 = tpu.matmul %140, %141, %cst_56 {dimension_numbers = #tpu.dot_dimension_numbers<[1], [0], [0], [1], [0, 0, 1, 1], [], []>} : vector<8x8xbf16>, vector<8x8xbf16>, vector<8x8xf32> -> vector<8x8xf32>
    %cst_57 = arith.constant dense<0xFF800000> : vector<8xf32>
    %143 = vector.multi_reduction <maximumf>, %142, %cst_57 [1] : vector<8x8xf32> to vector<8xf32>
    %144 = vector.shape_cast %143 : vector<8xf32> to vector<8x1xf32>
    %145 = vector.broadcast %144 : vector<8x1xf32> to vector<8x8xf32>
    %146 = arith.subf %142, %145 : vector<8x8xf32>
    %147 = math.exp %146 : vector<8x8xf32>
    %cst_58 = arith.constant dense<0.000000e+00> : vector<8xf32>
    %148 = vector.multi_reduction <add>, %147, %cst_58 [1] : vector<8x8xf32> to vector<8xf32>
    %149 = vector.shape_cast %148 : vector<8xf32> to vector<8x1xf32>
    %150 = tpu.reciprocal %149 {approx = true} : vector<8x1xf32> -> vector<8x1xf32>
    %151 = vector.broadcast %150 : vector<8x1xf32> to vector<8x8xf32>
    %152 = arith.mulf %147, %151 : vector<8x8xf32>
    %153 = arith.truncf %152 : vector<8x8xf32> to vector<8x8xbf16>
    %154 = arith.truncf %135 : vector<8x8xf32> to vector<8x8xbf16>
    %cst_59 = arith.constant dense<0.000000e+00> : vector<8x8xf32>
    %155 = tpu.matmul %153, %154, %cst_59 {dimension_numbers = #tpu.dot_dimension_numbers<[1], [0], [0], [1], [0, 0, 1, 1], [], []>} : vector<8x8xbf16>, vector<8x8xbf16>, vector<8x8xf32> -> vector<8x8xf32>
    %156 = arith.truncf %155 : vector<8x8xf32> to vector<8x8xbf16>
    %157 = arith.index_cast %c2_i32 : i32 to index
    %c0_60 = arith.constant 0 : index
    %c0_61 = arith.constant 0 : index
    %158 = vector.load %arg5[%157, %c0_60, %c0_61] : memref<4x8x32xbf16, #tpu.memory_space<vmem>>, vector<1x8x32xbf16>
    %159 = vector.shape_cast %158 : vector<1x8x32xbf16> to vector<8x32xbf16>
    %cst_62 = arith.constant dense<0.000000e+00> : vector<8x32xf32>
    %160 = tpu.matmul %156, %159, %cst_62 {dimension_numbers = #tpu.dot_dimension_numbers<[1], [0], [0], [1], [0, 0, 1, 1], [], []>} : vector<8x8xbf16>, vector<8x32xbf16>, vector<8x32xf32> -> vector<8x32xf32>
    %161 = arith.addf %118, %160 : vector<8x32xf32>
    %c3_i32 = arith.constant 3 : i32
    %162 = arith.index_cast %c3_i32 : i32 to index
    %c0_63 = arith.constant 0 : index
    %c0_64 = arith.constant 0 : index
    %163 = vector.load %arg6[%162, %c0_63, %c0_64] : memref<4x2x8xf32, #tpu.memory_space<vmem>>, vector<1x2x8xf32>
    %164 = vector.shape_cast %163 : vector<1x2x8xf32> to vector<2x8xf32>
    %165 = vector.extract_strided_slice %164 {offsets = [0, 0], sizes = [1, 8], strides = [1, 1]} : vector<2x8xf32> to vector<1x8xf32>
    %166 = vector.extract_strided_slice %164 {offsets = [1, 0], sizes = [1, 8], strides = [1, 1]} : vector<2x8xf32> to vector<1x8xf32>
    %167 = arith.index_cast %c3_i32 : i32 to index
    %c0_65 = arith.constant 0 : index
    %c0_66 = arith.constant 0 : index
    %168 = vector.load %arg2[%167, %c0_65, %c0_66] : memref<4x32x8xbf16, #tpu.memory_space<vmem>>, vector<1x32x8xbf16>
    %169 = vector.shape_cast %168 : vector<1x32x8xbf16> to vector<32x8xbf16>
    %cst_67 = arith.constant dense<0.000000e+00> : vector<8x8xf32>
    %170 = tpu.matmul %31, %169, %cst_67 {dimension_numbers = #tpu.dot_dimension_numbers<[1], [0], [0], [1], [0, 0, 1, 1], [], []>} : vector<8x32xbf16>, vector<32x8xbf16>, vector<8x8xf32> -> vector<8x8xf32>
    %171 = vector.broadcast %165 : vector<1x8xf32> to vector<8x8xf32>
    %172 = arith.addf %170, %171 : vector<8x8xf32>
    %173 = arith.index_cast %c3_i32 : i32 to index
    %c0_68 = arith.constant 0 : index
    %c0_69 = arith.constant 0 : index
    %174 = vector.load %arg4[%173, %c0_68, %c0_69] : memref<4x32x8xbf16, #tpu.memory_space<vmem>>, vector<1x32x8xbf16>
    %175 = vector.shape_cast %174 : vector<1x32x8xbf16> to vector<32x8xbf16>
    %cst_70 = arith.constant dense<0.000000e+00> : vector<8x8xf32>
    %176 = tpu.matmul %31, %175, %cst_70 {dimension_numbers = #tpu.dot_dimension_numbers<[1], [0], [0], [1], [0, 0, 1, 1], [], []>} : vector<8x32xbf16>, vector<32x8xbf16>, vector<8x8xf32> -> vector<8x8xf32>
    %177 = vector.broadcast %166 : vector<1x8xf32> to vector<8x8xf32>
    %178 = arith.addf %176, %177 : vector<8x8xf32>
    %179 = arith.index_cast %c3_i32 : i32 to index
    %c0_71 = arith.constant 0 : index
    %c0_72 = arith.constant 0 : index
    %180 = vector.load %arg3[%179, %c0_71, %c0_72] : memref<4x8x32xbf16, #tpu.memory_space<vmem>>, vector<1x8x32xbf16>
    %181 = vector.shape_cast %180 : vector<1x8x32xbf16> to vector<8x32xbf16>
    %cst_73 = arith.constant dense<0.000000e+00> : vector<8x8xf32>
    %182 = tpu.matmul %181, %31, %cst_73 {dimension_numbers = #tpu.dot_dimension_numbers<[1], [1], [0], [0], [0, 0, 1, 0], [], []>} : vector<8x32xbf16>, vector<8x32xbf16>, vector<8x8xf32> -> vector<8x8xf32>
    %183 = arith.truncf %172 : vector<8x8xf32> to vector<8x8xbf16>
    %184 = arith.truncf %182 : vector<8x8xf32> to vector<8x8xbf16>
    %cst_74 = arith.constant dense<0.000000e+00> : vector<8x8xf32>
    %185 = tpu.matmul %183, %184, %cst_74 {dimension_numbers = #tpu.dot_dimension_numbers<[1], [0], [0], [1], [0, 0, 1, 1], [], []>} : vector<8x8xbf16>, vector<8x8xbf16>, vector<8x8xf32> -> vector<8x8xf32>
    %cst_75 = arith.constant dense<0xFF800000> : vector<8xf32>
    %186 = vector.multi_reduction <maximumf>, %185, %cst_75 [1] : vector<8x8xf32> to vector<8xf32>
    %187 = vector.shape_cast %186 : vector<8xf32> to vector<8x1xf32>
    %188 = vector.broadcast %187 : vector<8x1xf32> to vector<8x8xf32>
    %189 = arith.subf %185, %188 : vector<8x8xf32>
    %190 = math.exp %189 : vector<8x8xf32>
    %cst_76 = arith.constant dense<0.000000e+00> : vector<8xf32>
    %191 = vector.multi_reduction <add>, %190, %cst_76 [1] : vector<8x8xf32> to vector<8xf32>
    %192 = vector.shape_cast %191 : vector<8xf32> to vector<8x1xf32>
    %193 = tpu.reciprocal %192 {approx = true} : vector<8x1xf32> -> vector<8x1xf32>
    %194 = vector.broadcast %193 : vector<8x1xf32> to vector<8x8xf32>
    %195 = arith.mulf %190, %194 : vector<8x8xf32>
    %196 = arith.truncf %195 : vector<8x8xf32> to vector<8x8xbf16>
    %197 = arith.truncf %178 : vector<8x8xf32> to vector<8x8xbf16>
    %cst_77 = arith.constant dense<0.000000e+00> : vector<8x8xf32>
    %198 = tpu.matmul %196, %197, %cst_77 {dimension_numbers = #tpu.dot_dimension_numbers<[1], [0], [0], [1], [0, 0, 1, 1], [], []>} : vector<8x8xbf16>, vector<8x8xbf16>, vector<8x8xf32> -> vector<8x8xf32>
    %199 = arith.truncf %198 : vector<8x8xf32> to vector<8x8xbf16>
    %200 = arith.index_cast %c3_i32 : i32 to index
    %c0_78 = arith.constant 0 : index
    %c0_79 = arith.constant 0 : index
    %201 = vector.load %arg5[%200, %c0_78, %c0_79] : memref<4x8x32xbf16, #tpu.memory_space<vmem>>, vector<1x8x32xbf16>
    %202 = vector.shape_cast %201 : vector<1x8x32xbf16> to vector<8x32xbf16>
    %cst_80 = arith.constant dense<0.000000e+00> : vector<8x32xf32>
    %203 = tpu.matmul %199, %202, %cst_80 {dimension_numbers = #tpu.dot_dimension_numbers<[1], [0], [0], [1], [0, 0, 1, 1], [], []>} : vector<8x8xbf16>, vector<8x32xbf16>, vector<8x32xf32> -> vector<8x32xf32>
    %204 = arith.addf %161, %203 : vector<8x32xf32>
    %c4_i32 = arith.constant 4 : i32
    %205 = arith.addf %1, %204 : vector<8x32xf32>
    %206 = vector.broadcast %7 : vector<1x32xf32> to vector<8x32xf32>
    %207 = arith.addf %205, %206 : vector<8x32xf32>
    %cst_81 = arith.constant dense<0.000000e+00> : vector<8xf32>
    %208 = vector.multi_reduction <add>, %207, %cst_81 [1] : vector<8x32xf32> to vector<8xf32>
    %209 = vector.shape_cast %208 : vector<8xf32> to vector<8x1xf32>
    %cst_82 = arith.constant 3.200000e+01 : f32
    %210 = vector.broadcast %cst_82 : f32 to vector<8x1xf32>
    %211 = arith.divf %209, %210 : vector<8x1xf32>
    %212 = vector.broadcast %211 : vector<8x1xf32> to vector<8x32xf32>
    %213 = arith.subf %207, %212 : vector<8x32xf32>
    %214 = arith.mulf %213, %213 : vector<8x32xf32>
    %cst_83 = arith.constant dense<0.000000e+00> : vector<8xf32>
    %215 = vector.multi_reduction <add>, %214, %cst_83 [1] : vector<8x32xf32> to vector<8xf32>
    %216 = vector.shape_cast %215 : vector<8xf32> to vector<8x1xf32>
    %cst_84 = arith.constant 3.200000e+01 : f32
    %217 = vector.broadcast %cst_84 : f32 to vector<8x1xf32>
    %218 = arith.divf %216, %217 : vector<8x1xf32>
    %219 = vector.broadcast %211 : vector<8x1xf32> to vector<8x32xf32>
    %220 = arith.subf %207, %219 : vector<8x32xf32>
    %cst_85 = arith.constant 9.99999974E-6 : f32
    %221 = vector.broadcast %cst_85 : f32 to vector<8x1xf32>
    %222 = arith.addf %218, %221 : vector<8x1xf32>
    %223 = math.rsqrt %222 : vector<8x1xf32>
    %224 = vector.broadcast %223 : vector<8x1xf32> to vector<8x32xf32>
    %225 = arith.mulf %220, %224 : vector<8x32xf32>
    %226 = vector.broadcast %5 : vector<1x32xf32> to vector<8x32xf32>
    %227 = arith.mulf %225, %226 : vector<8x32xf32>
    %228 = vector.broadcast %6 : vector<1x32xf32> to vector<8x32xf32>
    %229 = arith.addf %227, %228 : vector<8x32xf32>
    %230 = arith.truncf %229 : vector<8x32xf32> to vector<8x32xbf16>
    %c0_86 = arith.constant 0 : index
    %c0_87 = arith.constant 0 : index
    %231 = vector.load %arg7[%c0_86, %c0_87] : memref<32x128xbf16, #tpu.memory_space<vmem>>, vector<32x128xbf16>
    %cst_88 = arith.constant dense<0.000000e+00> : vector<8x128xf32>
    %232 = tpu.matmul %230, %231, %cst_88 {dimension_numbers = #tpu.dot_dimension_numbers<[1], [0], [0], [1], [0, 0, 1, 1], [], []>} : vector<8x32xbf16>, vector<32x128xbf16>, vector<8x128xf32> -> vector<8x128xf32>
    %c0_89 = arith.constant 0 : index
    %c0_90 = arith.constant 0 : index
    %233 = vector.load %arg9[%c0_89, %c0_90] : memref<1x128xf32, #tpu.memory_space<vmem>>, vector<1x128xf32>
    %234 = vector.broadcast %233 : vector<1x128xf32> to vector<8x128xf32>
    %235 = arith.addf %232, %234 : vector<8x128xf32>
    %cst_91 = arith.constant 5.000000e-01 : f32
    %236 = vector.broadcast %cst_91 : f32 to vector<8x128xf32>
    %237 = arith.mulf %236, %235 : vector<8x128xf32>
    %cst_92 = arith.constant 1.41421354 : f32
    %238 = vector.broadcast %cst_92 : f32 to vector<8x128xf32>
    %239 = arith.divf %235, %238 : vector<8x128xf32>
    %240 = math.erf %239 : vector<8x128xf32>
    %cst_93 = arith.constant 1.000000e+00 : f32
    %241 = vector.broadcast %cst_93 : f32 to vector<8x128xf32>
    %242 = arith.addf %241, %240 : vector<8x128xf32>
    %243 = arith.mulf %237, %242 : vector<8x128xf32>
    %244 = arith.truncf %243 : vector<8x128xf32> to vector<8x128xbf16>
    %c0_94 = arith.constant 0 : index
    %c0_95 = arith.constant 0 : index
    %245 = vector.load %arg8[%c0_94, %c0_95] : memref<128x32xbf16, #tpu.memory_space<vmem>>, vector<128x32xbf16>
    %cst_96 = arith.constant dense<0.000000e+00> : vector<8x32xf32>
    %246 = tpu.matmul %244, %245, %cst_96 {dimension_numbers = #tpu.dot_dimension_numbers<[1], [0], [0], [1], [0, 0, 1, 1], [], []>} : vector<8x128xbf16>, vector<128x32xbf16>, vector<8x32xf32> -> vector<8x32xf32>
    %247 = vector.broadcast %8 : vector<1x32xf32> to vector<8x32xf32>
    %248 = arith.addf %246, %247 : vector<8x32xf32>
    %249 = arith.addf %207, %248 : vector<8x32xf32>
    %c0_97 = arith.constant 0 : index
    %c0_98 = arith.constant 0 : index
    %c0_99 = arith.constant 0 : index
    %250 = vector.load %arg11[%c0_97, %c0_98, %c0_99] : memref<1x8x32xf32, #tpu.memory_space<vmem>>, vector<1x8x32xf32>
    %251 = vector.shape_cast %250 : vector<1x8x32xf32> to vector<8x32xf32>
    %252 = vector.shape_cast %249 : vector<8x32xf32> to vector<1x8x32xf32>
    tpu.vector_store %arg11[%c0_97, %c0_98, %c0_99], %252 {strides = array<i32>} : memref<1x8x32xf32, #tpu.memory_space<vmem>>, vector<1x8x32xf32>,
    return
  }
  func.func @transform_0(%arg0: i32) -> (i32, i32, i32) {
    %c0_i32 = arith.constant 0 : i32
    %c0_i32_0 = arith.constant 0 : i32
    %c0_i32_1 = arith.constant 0 : i32
    return %arg0, %c0_i32, %c0_i32_0 : i32, i32, i32
  }
  func.func @transform_1(%arg0: i32) -> (i32, i32, i32) {
    %c0_i32 = arith.constant 0 : i32
    %c0_i32_0 = arith.constant 0 : i32
    %c0_i32_1 = arith.constant 0 : i32
    %c0_i32_2 = arith.constant 0 : i32
    return %c0_i32, %c0_i32_0, %c0_i32_1 : i32, i32, i32
  }
  func.func @transform_2(%arg0: i32) -> (i32, i32, i32) {
    %c0_i32 = arith.constant 0 : i32
    %c0_i32_0 = arith.constant 0 : i32
    %c0_i32_1 = arith.constant 0 : i32
    %c0_i32_2 = arith.constant 0 : i32
    return %c0_i32, %c0_i32_0, %c0_i32_1 : i32, i32, i32
  }
  func.func @transform_3(%arg0: i32) -> (i32, i32, i32) {
    %c0_i32 = arith.constant 0 : i32
    %c0_i32_0 = arith.constant 0 : i32
    %c0_i32_1 = arith.constant 0 : i32
    %c0_i32_2 = arith.constant 0 : i32
    return %c0_i32, %c0_i32_0, %c0_i32_1 : i32, i32, i32
  }
  func.func @transform_4(%arg0: i32) -> (i32, i32, i32) {
    %c0_i32 = arith.constant 0 : i32
    %c0_i32_0 = arith.constant 0 : i32
    %c0_i32_1 = arith.constant 0 : i32
    %c0_i32_2 = arith.constant 0 : i32
    return %c0_i32, %c0_i32_0, %c0_i32_1 : i32, i32, i32
  }
  func.func @transform_5(%arg0: i32) -> (i32, i32, i32) {
    %c0_i32 = arith.constant 0 : i32
    %c0_i32_0 = arith.constant 0 : i32
    %c0_i32_1 = arith.constant 0 : i32
    %c0_i32_2 = arith.constant 0 : i32
    return %c0_i32, %c0_i32_0, %c0_i32_1 : i32, i32, i32
  }
  func.func @transform_6(%arg0: i32) -> (i32, i32) {
    %c0_i32 = arith.constant 0 : i32
    %c0_i32_0 = arith.constant 0 : i32
    %c0_i32_1 = arith.constant 0 : i32
    return %c0_i32, %c0_i32_0 : i32, i32
  }
  func.func @transform_7(%arg0: i32) -> (i32, i32) {
    %c0_i32 = arith.constant 0 : i32
    %c0_i32_0 = arith.constant 0 : i32
    %c0_i32_1 = arith.constant 0 : i32
    return %c0_i32, %c0_i32_0 : i32, i32
  }
  func.func @transform_8(%arg0: i32) -> (i32, i32) {
    %c0_i32 = arith.constant 0 : i32
    %c0_i32_0 = arith.constant 0 : i32
    %c0_i32_1 = arith.constant 0 : i32
    return %c0_i32, %c0_i32_0 : i32, i32
  }
  func.func @transform_9(%arg0: i32) -> (i32, i32) {
    %c0_i32 = arith.constant 0 : i32
    %c0_i32_0 = arith.constant 0 : i32
    %c0_i32_1 = arith.constant 0 : i32
    return %c0_i32, %c0_i32_0 : i32, i32
  }
  func.func @transform_10(%arg0: i32) -> (i32, i32, i32) {
    %c0_i32 = arith.constant 0 : i32
    %c0_i32_0 = arith.constant 0 : i32
    %c0_i32_1 = arith.constant 0 : i32
    return %arg0, %c0_i32, %c0_i32_0 : i32, i32, i32
  }
}

</mosaic_0001>

<llo_original>
// kernel: tpu_custom_call.1
$region0: #{tpu_custom_call.1}
  #allocation0 [shape = 'u32[]', space=smem, size = 0x4, offset = 0x4, fixed_abs, tag = 'smem constant byte address 0x4 - core index']
  #allocation1 [shape = 'u32[144,128]{1,0:T(1,128)}', space=vmem, size = 0x12000, scoped, tag = 'internal scratch']
  %s0 = inlined_call_operand.vmem [shape: f32[2,8,32], index: 0, kind: input, shape index: {}]
  %s1 = inlined_call_operand.vmem [shape: bf16[4,32,8], index: 1, kind: input, shape index: {}]
  %s2 = inlined_call_operand.vmem [shape: bf16[4,8,32], index: 2, kind: input, shape index: {}]
  %s3 = inlined_call_operand.vmem [shape: bf16[4,32,8], index: 3, kind: input, shape index: {}]
  %s4 = inlined_call_operand.vmem [shape: bf16[4,8,32], index: 4, kind: input, shape index: {}]
  %s5 = inlined_call_operand.vmem [shape: f32[4,2,8], index: 5, kind: input, shape index: {}]
  %s6 = inlined_call_operand.vmem [shape: bf16[32,128], index: 6, kind: input, shape index: {}]
  %s7 = inlined_call_operand.vmem [shape: bf16[128,32], index: 7, kind: input, shape index: {}]
  %s8 = inlined_call_operand.vmem [shape: f32[1,128], index: 8, kind: input, shape index: {}]
  %s9 = inlined_call_operand.vmem [shape: f32[6,32], index: 9, kind: input, shape index: {}]
  %s10 = inlined_call_operand.hbm [shape: f32[2,8,32], index: 10, kind: output, shape index: {}]
  %s11 = sld [smem:[#allocation0]]
  $region73: #{tpu_custom_call.1} parent=0
    _
  %s13 = ssub.s32 1, %s11
  %s14 = scalar_select 0, %s13, %s11
  $region1: #{tpu_custom_call.1} parent=0
    #allocation2 [shape = 'u8[8192]{0}', space=vmem, size = 0x2000, scoped, tag = 'output window, operand 0']
    #allocation3 [shape = 's32[2]{0}', space=sflag, size = 0x8, scoped, tag = 'scoped memory for tpu_custom_call.1']
    %15 = vsyncpa [#allocation3], 0
    %s16 = scalar_lea.sflag [#allocation3], 1
    %17 = vsyncpa %s16, 0
    loop: start=0, step=1, limit=4
    $region2: #{tpu_custom_call.1} parent=1 // loop_pre_header
      _
    $region3: #{tpu_custom_call.1} parent=1 // loop_header
      %s19 = sphi 0, %s23
      %p20 = scmp.ge.s32.totalorder %s19, 4
      %s29 = sphi 0, %s31
      %s32 = sphi 0, %s29
      %s33 = sphi 0, %s32
      %s49 = sphi 0, %s33
      %s53 = sphi 0, %s53
      %s55 = sphi 0, %s53
      %s56 = sphi 0, %s55
      %s70 = sphi 0, %s56
      %s74 = sphi 0, %s74
      %s76 = sphi 0, %s74
      %s77 = sphi 0, %s76
      %s91 = sphi 0, %s77
      %s95 = sphi 0, %s95
      %s97 = sphi 0, %s95
      %s98 = sphi 0, %s97
      %s112 = sphi 0, %s98
      %s116 = sphi 0, %s116
      %s118 = sphi 0, %s116
      %s119 = sphi 0, %s118
      %s133 = sphi 0, %s119
      %s137 = sphi 0, %s137
      %s139 = sphi 0, %s137
      %s140 = sphi 0, %s139
      %s154 = sphi 0, %s140
      %s158 = sphi 0, %s158
      %s160 = sphi 0, %s158
      %s161 = sphi 0, %s160
      %s175 = sphi 0, %s161
      %s179 = sphi 0, %s179
      %s181 = sphi 0, %s179
      %s182 = sphi 0, %s181
      %s196 = sphi 0, %s182
      %s200 = sphi 0, %s200
      %s202 = sphi 0, %s200
      %s203 = sphi 0, %s202
      %s217 = sphi 0, %s203
      %s221 = sphi 0, %s221
      %s223 = sphi 0, %s221
      %s224 = sphi 0, %s223
      %s238 = sphi 0, %s224
      %s244 = sphi 0, %s246
      %s247 = sphi 0, %s244
      %s248 = sphi 0, %s247
      %s264 = sphi 0, %s248
    $region4: #{tpu_custom_call.1} parent=1 // loop_header_branch
      %22 = sbr.rel (%p20) target = $region8
    $region5: #{tpu_custom_call.1} parent=1 // loop_body
      %s24 = ssub.s32 %s19, 1
      %s25 = ssub.s32 %s19, 2
      %s26 = sadd.s32 %s19, 1
      %s27 = ssub.s32 %s19, %s26
      %p28 = scmp.eq.s32.totalorder %s27, 0
      %s30 = sadd.s32 %s29, 1
      %s31 = scalar_select %p28, %s29, %s30
      %p34 = pneg %p28
      %p35 = scmp.eq.s32.totalorder %s19, 1
      %p36 = por %p34, %p35
      %p37 = scmp.ne.s32.totalorder %s29, %s32
      %p38 = scmp.eq.s32.totalorder %s19, 0
      %p39 = por %p37, %p38
      %p40 = scmp.ne.s32.totalorder %s29, %s32
      %p41 = scmp.eq.s32.totalorder %s24, 1
      %p42 = por %p40, %p41
      %p43 = scmp.ne.s32.totalorder %s32, %s33
      %p44 = scmp.eq.s32.totalorder %s24, 0
      %p45 = por %p43, %p44
      %p46 = scmp.ne.s32.totalorder %s32, %s33
      %p47 = scmp.eq.s32.totalorder %s25, 1
      %p48 = por %p46, %p47
      %p50 = scmp.ne.s32.totalorder %s33, %s49
      %p51 = scmp.eq.s32.totalorder %s25, 0
      %p52 = por %p50, %p51
      %s54 = sadd.s32 %s53, 1
      %p57 = scmp.eq.s32.totalorder %s19, 1
      %p58 = scmp.ne.s32.totalorder %s53, %s55
      %p59 = scmp.eq.s32.totalorder %s19, 0
      %p60 = por %p58, %p59
      %p61 = scmp.ne.s32.totalorder %s53, %s55
      %p62 = scmp.eq.s32.totalorder %s24, 1
      %p63 = por %p61, %p62
      %p64 = scmp.ne.s32.totalorder %s55, %s56
      %p65 = scmp.eq.s32.totalorder %s24, 0
      %p66 = por %p64, %p65
      %p67 = scmp.ne.s32.totalorder %s55, %s56
      %p68 = scmp.eq.s32.totalorder %s25, 1
      %p69 = por %p67, %p68
      %p71 = scmp.ne.s32.totalorder %s56, %s70
      %p72 = scmp.eq.s32.totalorder %s25, 0
      %p73 = por %p71, %p72
      %s75 = sadd.s32 %s74, 1
      %p78 = scmp.eq.s32.totalorder %s19, 1
      %p79 = scmp.ne.s32.totalorder %s74, %s76
      %p80 = scmp.eq.s32.totalorder %s19, 0
      %p81 = por %p79, %p80
      %p82 = scmp.ne.s32.totalorder %s74, %s76
      %p83 = scmp.eq.s32.totalorder %s24, 1
      %p84 = por %p82, %p83
      %p85 = scmp.ne.s32.totalorder %s76, %s77
      %p86 = scmp.eq.s32.totalorder %s24, 0
      %p87 = por %p85, %p86
      %p88 = scmp.ne.s32.totalorder %s76, %s77
      %p89 = scmp.eq.s32.totalorder %s25, 1
      %p90 = por %p88, %p89
      %p92 = scmp.ne.s32.totalorder %s77, %s91
      %p93 = scmp.eq.s32.totalorder %s25, 0
      %p94 = por %p92, %p93
      %s96 = sadd.s32 %s95, 1
      %p99 = scmp.eq.s32.totalorder %s19, 1
      %p100 = scmp.ne.s32.totalorder %s95, %s97
      %p101 = scmp.eq.s32.totalorder %s19, 0
      %p102 = por %p100, %p101
      %p103 = scmp.ne.s32.totalorder %s95, %s97
      %p104 = scmp.eq.s32.totalorder %s24, 1
      %p105 = por %p103, %p104
      %p106 = scmp.ne.s32.totalorder %s97, %s98
      %p107 = scmp.eq.s32.totalorder %s24, 0
      %p108 = por %p106, %p107
      %p109 = scmp.ne.s32.totalorder %s97, %s98
      %p110 = scmp.eq.s32.totalorder %s25, 1
      %p111 = por %p109, %p110
      %p113 = scmp.ne.s32.totalorder %s98, %s112
      %p114 = scmp.eq.s32.totalorder %s25, 0
      %p115 = por %p113, %p114
      %s117 = sadd.s32 %s116, 1
      %p120 = scmp.eq.s32.totalorder %s19, 1
      %p121 = scmp.ne.s32.totalorder %s116, %s118
      %p122 = scmp.eq.s32.totalorder %s19, 0
      %p123 = por %p121, %p122
      %p124 = scmp.ne.s32.totalorder %s116, %s118
      %p125 = scmp.eq.s32.totalorder %s24, 1
      %p126 = por %p124, %p125
      %p127 = scmp.ne.s32.totalorder %s118, %s119
      %p128 = scmp.eq.s32.totalorder %s24, 0
      %p129 = por %p127, %p128
      %p130 = scmp.ne.s32.totalorder %s118, %s119
      %p131 = scmp.eq.s32.totalorder %s25, 1
      %p132 = por %p130, %p131
      %p134 = scmp.ne.s32.totalorder %s119, %s133
      %p135 = scmp.eq.s32.totalorder %s25, 0
      %p136 = por %p134, %p135
      %s138 = sadd.s32 %s137, 1
      %p141 = scmp.eq.s32.totalorder %s19, 1
      %p142 = scmp.ne.s32.totalorder %s137, %s139
      %p143 = scmp.eq.s32.totalorder %s19, 0
      %p144 = por %p142, %p143
      %p145 = scmp.ne.s32.totalorder %s137, %s139
      %p146 = scmp.eq.s32.totalorder %s24, 1
      %p147 = por %p145, %p146
      %p148 = scmp.ne.s32.totalorder %s139, %s140
      %p149 = scmp.eq.s32.totalorder %s24, 0
      %p150 = por %p148, %p149
      %p151 = scmp.ne.s32.totalorder %s139, %s140
      %p152 = scmp.eq.s32.totalorder %s25, 1
      %p153 = por %p151, %p152
      %p155 = scmp.ne.s32.totalorder %s140, %s154
      %p156 = scmp.eq.s32.totalorder %s25, 0
      %p157 = por %p155, %p156
      %s159 = sadd.s32 %s158, 1
      %p162 = scmp.eq.s32.totalorder %s19, 1
      %p163 = scmp.ne.s32.totalorder %s158, %s160
      %p164 = scmp.eq.s32.totalorder %s19, 0
      %p165 = por %p163, %p164
      %p166 = scmp.ne.s32.totalorder %s158, %s160
      %p167 = scmp.eq.s32.totalorder %s24, 1
      %p168 = por %p166, %p167
      %p169 = scmp.ne.s32.totalorder %s160, %s161
      %p170 = scmp.eq.s32.totalorder %s24, 0
      %p171 = por %p169, %p170
      %p172 = scmp.ne.s32.totalorder %s160, %s161
      %p173 = scmp.eq.s32.totalorder %s25, 1
      %p174 = por %p172, %p173
      %p176 = scmp.ne.s32.totalorder %s161, %s175
      %p177 = scmp.eq.s32.totalorder %s25, 0
      %p178 = por %p176, %p177
      %s180 = sadd.s32 %s179, 1
      %p183 = scmp.eq.s32.totalorder %s19, 1
      %p184 = scmp.ne.s32.totalorder %s179, %s181
      %p185 = scmp.eq.s32.totalorder %s19, 0
      %p186 = por %p184, %p185
      %p187 = scmp.ne.s32.totalorder %s179, %s181
      %p188 = scmp.eq.s32.totalorder %s24, 1
      %p189 = por %p187, %p188
      %p190 = scmp.ne.s32.totalorder %s181, %s182
      %p191 = scmp.eq.s32.totalorder %s24, 0
      %p192 = por %p190, %p191
      %p193 = scmp.ne.s32.totalorder %s181, %s182
      %p194 = scmp.eq.s32.totalorder %s25, 1
      %p195 = por %p193, %p194
      %p197 = scmp.ne.s32.totalorder %s182, %s196
      %p198 = scmp.eq.s32.totalorder %s25, 0
      %p199 = por %p197, %p198
      %s201 = sadd.s32 %s200, 1
      %p204 = scmp.eq.s32.totalorder %s19, 1
      %p205 = scmp.ne.s32.totalorder %s200, %s202
      %p206 = scmp.eq.s32.totalorder %s19, 0
      %p207 = por %p205, %p206
      %p208 = scmp.ne.s32.totalorder %s200, %s202
      %p209 = scmp.eq.s32.totalorder %s24, 1
      %p210 = por %p208, %p209
      %p211 = scmp.ne.s32.totalorder %s202, %s203
      %p212 = scmp.eq.s32.totalorder %s24, 0
      %p213 = por %p211, %p212
      %p214 = scmp.ne.s32.totalorder %s202, %s203
      %p215 = scmp.eq.s32.totalorder %s25, 1
      %p216 = por %p214, %p215
      %p218 = scmp.ne.s32.totalorder %s203, %s217
      %p219 = scmp.eq.s32.totalorder %s25, 0
      %p220 = por %p218, %p219
      %s222 = sadd.s32 %s221, 1
      %p225 = scmp.eq.s32.totalorder %s19, 1
      %p226 = scmp.ne.s32.totalorder %s221, %s223
      %p227 = scmp.eq.s32.totalorder %s19, 0
      %p228 = por %p226, %p227
      %p229 = scmp.ne.s32.totalorder %s221, %s223
      %p230 = scmp.eq.s32.totalorder %s24, 1
      %p231 = por %p229, %p230
      %p232 = scmp.ne.s32.totalorder %s223, %s224
      %p233 = scmp.eq.s32.totalorder %s24, 0
      %p234 = por %p232, %p233
      %p235 = scmp.ne.s32.totalorder %s223, %s224
      %p236 = scmp.eq.s32.totalorder %s25, 1
      %p237 = por %p235, %p236
      %p239 = scmp.ne.s32.totalorder %s224, %s238
      %p240 = scmp.eq.s32.totalorder %s25, 0
      %p241 = por %p239, %p240
      %s242 = ssub.s32 %s19, %s26
      %p243 = scmp.eq.s32.totalorder %s242, 0
      %s245 = sadd.s32 %s244, 1
      %s246 = scalar_select %p243, %s244, %s245
      %p249 = pneg %p243
      %p250 = scmp.eq.s32.totalorder %s19, 1
      %p251 = por %p249, %p250
      %p252 = scmp.ne.s32.totalorder %s244, %s247
      %p253 = scmp.eq.s32.totalorder %s19, 0
      %p254 = por %p252, %p253
      %p255 = scmp.ne.s32.totalorder %s244, %s247
      %p256 = scmp.eq.s32.totalorder %s24, 1
      %p257 = por %p255, %p256
      %p258 = scmp.ne.s32.totalorder %s247, %s248
      %p259 = scmp.eq.s32.totalorder %s24, 0
      %p260 = por %p258, %p259
      %p261 = scmp.ne.s32.totalorder %s247, %s248
      %p262 = scmp.eq.s32.totalorder %s25, 1
      %p263 = por %p261, %p262
      %p265 = scmp.ne.s32.totalorder %s248, %s264
      %p266 = scmp.eq.s32.totalorder %s25, 0
      %p267 = por %p265, %p266
      %p268 = scmp.le.s32.totalorder 1, %s19
      %p269 = scmp.lt.s32.totalorder %s19, 3
      %p270 = pnand %p268, %p269
      %p271 = pneg %p270
      // Predicated region
      $region9: #{tpu_custom_call.1} parent=5 // pred_check
        _
      $region10: #{tpu_custom_call.1} parent=5 // pred_check_branch
        %273 = sbr.rel (%p270) target = $region12
      $region11: #{tpu_custom_call.1} parent=5 // pred_region
        %s274 = ssub.s32 %s19, 1
        // Predicated region
        $region13: #{tpu_custom_call.1} parent=11 // pred_check
          %p275 = pneg %p66
        $region14: #{tpu_custom_call.1} parent=11 // pred_check_branch
          %277 = sbr.rel (%p275) target = $region16
        $region15: #{tpu_custom_call.1} parent=11 // pred_region
          _
        $region16: #{tpu_custom_call.1} parent=11 // pred_fallthru
          _
        // Predicated region
        $region17: #{tpu_custom_call.1} parent=11 // pred_check
          %p278 = pneg %p87
        $region18: #{tpu_custom_call.1} parent=11 // pred_check_branch
          %280 = sbr.rel (%p278) target = $region20
        $region19: #{tpu_custom_call.1} parent=11 // pred_region
          _
        $region20: #{tpu_custom_call.1} parent=11 // pred_fallthru
          _
        // Predicated region
        $region21: #{tpu_custom_call.1} parent=11 // pred_check
          %p281 = pneg %p108
        $region22: #{tpu_custom_call.1} parent=11 // pred_check_branch
          %283 = sbr.rel (%p281) target = $region24
        $region23: #{tpu_custom_call.1} parent=11 // pred_region
          _
        $region24: #{tpu_custom_call.1} parent=11 // pred_fallthru
          _
        // Predicated region
        $region25: #{tpu_custom_call.1} parent=11 // pred_check
          %p284 = pneg %p129
        $region26: #{tpu_custom_call.1} parent=11 // pred_check_branch
          %286 = sbr.rel (%p284) target = $region28
        $region27: #{tpu_custom_call.1} parent=11 // pred_region
          _
        $region28: #{tpu_custom_call.1} parent=11 // pred_fallthru
          _
        // Predicated region
        $region29: #{tpu_custom_call.1} parent=11 // pred_check
          %p287 = pneg %p150
        $region30: #{tpu_custom_call.1} parent=11 // pred_check_branch
          %289 = sbr.rel (%p287) target = $region32
        $region31: #{tpu_custom_call.1} parent=11 // pred_region
          _
        $region32: #{tpu_custom_call.1} parent=11 // pred_fallthru
          _
        // Predicated region
        $region33: #{tpu_custom_call.1} parent=11 // pred_check
          %p290 = pneg %p171
        $region34: #{tpu_custom_call.1} parent=11 // pred_check_branch
          %292 = sbr.rel (%p290) target = $region36
        $region35: #{tpu_custom_call.1} parent=11 // pred_region
          _
        $region36: #{tpu_custom_call.1} parent=11 // pred_fallthru
          _
        // Predicated region
        $region37: #{tpu_custom_call.1} parent=11 // pred_check
          %p293 = pneg %p192
        $region38: #{tpu_custom_call.1} parent=11 // pred_check_branch
          %295 = sbr.rel (%p293) target = $region40
        $region39: #{tpu_custom_call.1} parent=11 // pred_region
          _
        $region40: #{tpu_custom_call.1} parent=11 // pred_fallthru
          _
        // Predicated region
        $region41: #{tpu_custom_call.1} parent=11 // pred_check
          %p296 = pneg %p213
        $region42: #{tpu_custom_call.1} parent=11 // pred_check_branch
          %298 = sbr.rel (%p296) target = $region44
        $region43: #{tpu_custom_call.1} parent=11 // pred_region
          _
        $region44: #{tpu_custom_call.1} parent=11 // pred_fallthru
          _
        // Predicated region
        $region45: #{tpu_custom_call.1} parent=11 // pred_check
          %p299 = pneg %p234
        $region46: #{tpu_custom_call.1} parent=11 // pred_check_branch
          %301 = sbr.rel (%p299) target = $region48
        $region47: #{tpu_custom_call.1} parent=11 // pred_region
          _
        $region48: #{tpu_custom_call.1} parent=11 // pred_fallthru
          _
      $region12: #{tpu_custom_call.1} parent=5 // pred_fallthru
        _
      %p302 = scmp.lt.s32.totalorder %s19, 2
      // Predicated region
      $region49: #{tpu_custom_call.1} parent=5 // pred_check
        %p303 = pneg %p302
      $region50: #{tpu_custom_call.1} parent=5 // pred_check_branch
        %305 = sbr.rel (%p303) target = $region52
      $region51: #{tpu_custom_call.1} parent=5 // pred_region
        // Predicated region
        $region53: #{tpu_custom_call.1} parent=51 // pred_check
          %p306 = pneg %p39
        $region54: #{tpu_custom_call.1} parent=51 // pred_check_branch
          %308 = sbr.rel (%p306) target = $region56
        $region55: #{tpu_custom_call.1} parent=51 // pred_region
          %p309 = scmp.lt.s32.totalorder %s19, 1
          %s310 = scalar_select %p309, %s19, 1
          %s311 = smul.addr %s310, 8
          %s312 = scalar_lea.vmem %s0, %s311
        $region56: #{tpu_custom_call.1} parent=51 // pred_fallthru
          _
      $region52: #{tpu_custom_call.1} parent=5 // pred_fallthru
        _
      %p313 = scmp.le.s32.totalorder 1, %s19
      %p314 = scmp.lt.s32.totalorder %s19, 3
      %p315 = pnand %p313, %p314
      %p316 = pneg %p315
      // Predicated region
      $region57: #{tpu_custom_call.1} parent=5 // pred_check
        _
      $region58: #{tpu_custom_call.1} parent=5 // pred_check_branch
        %318 = sbr.rel (%p315) target = $region60
      $region59: #{tpu_custom_call.1} parent=5 // pred_region
        %s319 = ssub.s32 %s19, 1
        %p320 = scmp.lt.s32.totalorder %s24, 1
        %s321 = scalar_select %p320, %s24, 1
        %s322 = smul.addr %s321, 8
        %s323 = scalar_lea.vmem %s0, %s322
        %p324 = pneg %p45
        %p325 = pneg %p42
        %p326 = pneg %p66
        %p327 = pneg %p63
        %p328 = pneg %p87
        %p329 = pneg %p84
        %p330 = pneg %p108
        %p331 = pneg %p105
        %p332 = pneg %p129
        %p333 = pneg %p126
        %p334 = pneg %p150
        %p335 = pneg %p147
        %p336 = pneg %p171
        %p337 = pneg %p168
        %p338 = pneg %p192
        %p339 = pneg %p189
        %p340 = pneg %p213
        %p341 = pneg %p210
        %p342 = pneg %p234
        %p343 = pneg %p231
        %p344 = pneg %p260
        %p345 = pneg %p257
        %s346 = sand.u32 %s247, 1
        %s347 = scalar_lea.sflag [#allocation3], %s346
        %s348 = sand.u32 %s247, 1
        %s349 = smul.addr %s348, 8
        %s350 = scalar_lea.vmem [#allocation2], %s349
        %p351 = scmp.lt.s32.totalorder %s24, 1
        %s352 = scalar_select %p351, %s24, 1
        %s353 = smul.addr %s352, 8
        %s354 = scalar_lea.vmem %s0, %s353
        %v356 = vld [vmem:[%s354] sm:$0xff]
        %v357 = vld [vmem:[%s9] sm:$0x3f]
        %vm358 = vcmask 261120
        %v359 = vsel %vm358, %v356, 0.0
        %360 = vadd.xlane.f32.xlu0 %v359
        %v361 = vpop.xlane.xlu0 %360
        %v362 = vrcp.pop 32.0
        %v363 = vmul.f32 %v361, %v362
        %v364 = vsub.f32 %v356, %v363
        %v365 = vmul.f32 %v364, %v364
        %v366 = vsel %vm358, %v365, 0.0
        %367 = vadd.xlane.f32.xlu0 %v366
        %v368 = vpop.xlane.xlu0 %367
        %v369 = vmul.f32 %v368, %v362
        %v370 = vadd.f32 %v369, 1e-05
        %v371 = vrsqrt.pop %v370
        %v372 = vmul.f32 %v364, %v371
        %v373 = vlaneseq
        %v374 = vshrl.u32 %v373, 7
        %v375 = vsub.s32 0, %v374
        %v376 = vrot.slane %v357, %v375
        %v377 = vmul.f32 %v372, %v376
        %v378 = vlaneseq
        %v379 = vshrl.u32 %v378, 7
        %v380 = vsub.s32 1, %v379
        %v381 = vrot.slane %v357, %v380
        %v382 = vadd.f32 %v377, %v381
        %v383 = vpack.c.bf16 %v382, %v382
        %v384 = vld [vmem:[%s5] sm:$0x3]
        %v385 = vld [vmem:[%s1] sm:$0xf]
        %v386 = vld [vmem:[%s1 + $0x4] sm:$0xf]
        %v387 = vld [vmem:[%s1 + $0x8] sm:$0xf]
        %v388 = vld [vmem:[%s1 + $0xc] sm:$0xf]
        %v389 = vlaneseq
        %v390 = vshrl.u32 %v389, 7
        %v391 = vsub.s32 0, %v390
        %v392 = vrot.slane %v384, %v391
        %v397 = vunpack.c.l.b16 %v385
        %v398 = vunpack.c.l.b16 %v386
        %v399 = vunpack.c.l.b16 %v387
        %v400 = vunpack.c.l.b16 %v388
        %v401 = vpack.c.b16 %v398, %v397
        %v402 = vpack.c.b16 %v400, %v399
        %v406 = vsel %vm358, %v383, 0
        %408 = vmatprep.subr.bf16.mxu0 0
        %409 = vmatpush1.bf16.msra.mxu0 %v401
        %410 = vmatprep.subr.bf16.mxu0 0
        %411 = vmatpush1.bf16.msra.mxu0 %v402
        %412 = vmatprep.subr.bf16.mxu0 0
        %413 = vmatpush1.bf16.msra.mxu0 0
        %414 = vmatprep.subr.bf16.mxu0 0
        %415 = vmatpush1.bf16.msra.mxu0 0
        %416 = vmatprep.subr.bf16.mxu0 0
        %417 = vmatpush1.bf16.msra.mxu0 0
        %418 = vmatprep.subr.bf16.mxu0 0
        %419 = vmatpush1.bf16.msra.mxu0 0
        %420 = vmatprep.subr.bf16.mxu0 0
        %421 = vmatpush1.bf16.msra.mxu0 0
        %422 = vmatprep.subr.bf16.mxu0 0
        %423 = vmatpush1.bf16.msra.mxu0 0
        %424 = vmatprep.subr.bf16.mxu0 0
        %425 = vmatpush1.bf16.msra.mxu0 0
        %426 = vmatprep.subr.bf16.mxu0 0
        %427 = vmatpush1.bf16.msra.mxu0 0
        %428 = vmatprep.subr.bf16.mxu0 0
        %429 = vmatpush1.bf16.msra.mxu0 0
        %430 = vmatprep.subr.bf16.mxu0 0
        %431 = vmatpush1.bf16.msra.mxu0 0
        %432 = vmatprep.subr.bf16.mxu0 0
        %433 = vmatpush1.bf16.msra.mxu0 0
        %434 = vmatprep.subr.bf16.mxu0 0
        %435 = vmatpush1.bf16.msra.mxu0 0
        %436 = vmatprep.subr.bf16.mxu0 0
        %437 = vmatpush1.bf16.msra.mxu0 0
        %438 = vmatprep.subr.bf16.mxu0 0
        %439 = vmatpush1.bf16.msra.mxu0 0
        %440 = vmatprep.mubr.bf16.mxu0 0
        %441 = vmatmul.mubr.bf16.gmra.mrb[0].mxu0 %v406
        %v442 = vpop.f32.mrb[0].mxu0
        %v443 = vadd.f32 %v392, %v442
        %v444 = vpop.f32.mrb[0].mxu0
        %v445 = vpop.f32.mrb[0].mxu0
        %v446 = vpop.f32.mrb[0].mxu0
        %447 = vdwg.mxu0
        %v448 = vld [vmem:[%s3] sm:$0xf]
        %v449 = vld [vmem:[%s3 + $0x4] sm:$0xf]
        %v450 = vld [vmem:[%s3 + $0x8] sm:$0xf]
        %v451 = vld [vmem:[%s3 + $0xc] sm:$0xf]
        %v452 = vlaneseq
        %v453 = vshrl.u32 %v452, 7
        %v454 = vsub.s32 1, %v453
        %v455 = vrot.slane %v384, %v454
        %v460 = vunpack.c.l.b16 %v448
        %v461 = vunpack.c.l.b16 %v449
        %v462 = vunpack.c.l.b16 %v450
        %v463 = vunpack.c.l.b16 %v451
        %v464 = vpack.c.b16 %v461, %v460
        %v465 = vpack.c.b16 %v463, %v462
        %468 = vmatprep.subr.bf16.mxu0 0
        %469 = vmatpush1.bf16.msra.mxu0 %v464
        %470 = vmatprep.subr.bf16.mxu0 0
        %471 = vmatpush1.bf16.msra.mxu0 %v465
        %472 = vmatprep.subr.bf16.mxu0 0
        %473 = vmatpush1.bf16.msra.mxu0 0
        %474 = vmatprep.subr.bf16.mxu0 0
        %475 = vmatpush1.bf16.msra.mxu0 0
        %476 = vmatprep.subr.bf16.mxu0 0
        %477 = vmatpush1.bf16.msra.mxu0 0
        %478 = vmatprep.subr.bf16.mxu0 0
        %479 = vmatpush1.bf16.msra.mxu0 0
        %480 = vmatprep.subr.bf16.mxu0 0
        %481 = vmatpush1.bf16.msra.mxu0 0
        %482 = vmatprep.subr.bf16.mxu0 0
        %483 = vmatpush1.bf16.msra.mxu0 0
        %484 = vmatprep.subr.bf16.mxu0 0
        %485 = vmatpush1.bf16.msra.mxu0 0
        %486 = vmatprep.subr.bf16.mxu0 0
        %487 = vmatpush1.bf16.msra.mxu0 0
        %488 = vmatprep.subr.bf16.mxu0 0
        %489 = vmatpush1.bf16.msra.mxu0 0
        %490 = vmatprep.subr.bf16.mxu0 0
        %491 = vmatpush1.bf16.msra.mxu0 0
        %492 = vmatprep.subr.bf16.mxu0 0
        %493 = vmatpush1.bf16.msra.mxu0 0
        %494 = vmatprep.subr.bf16.mxu0 0
        %495 = vmatpush1.bf16.msra.mxu0 0
        %496 = vmatprep.subr.bf16.mxu0 0
        %497 = vmatpush1.bf16.msra.mxu0 0
        %498 = vmatprep.subr.bf16.mxu0 0
        %499 = vmatpush1.bf16.msra.mxu0 0
        %500 = vmatprep.mubr.bf16.mxu0 0
        %501 = vmatmul.mubr.bf16.gmra.mrb[0].mxu0 %v406
        %v502 = vpop.f32.mrb[0].mxu0
        %v503 = vadd.f32 %v455, %v502
        %v504 = vpop.f32.mrb[0].mxu0
        %v505 = vpop.f32.mrb[0].mxu0
        %v506 = vpop.f32.mrb[0].mxu0
        %507 = vdwg.mxu0
        %v508 = vld [vmem:[%s2] sm:$0xf]
        %v510 = vsel %vm358, %v508, 0
        %512 = vmatprep.subr.bf16.mxu0 0
        %513 = vmatpush1.bf16.xpose.msra.mxu0 %v406
        %514 = vmatprep.subr.bf16.mxu0 0
        %515 = vmatpush1.bf16.xpose.msra.mxu0 0
        %516 = vmatprep.subr.bf16.mxu0 0
        %517 = vmatpush1.bf16.xpose.msra.mxu0 0
        %518 = vmatprep.subr.bf16.mxu0 0
        %519 = vmatpush1.bf16.xpose.msra.mxu0 0
        %520 = vmatprep.subr.bf16.mxu0 0
        %521 = vmatpush1.bf16.xpose.msra.mxu0 0
        %522 = vmatprep.subr.bf16.mxu0 0
        %523 = vmatpush1.bf16.xpose.msra.mxu0 0
        %524 = vmatprep.subr.bf16.mxu0 0
        %525 = vmatpush1.bf16.xpose.msra.mxu0 0
        %526 = vmatprep.subr.bf16.mxu0 0
        %527 = vmatpush1.bf16.xpose.msra.mxu0 0
        %528 = vmatprep.subr.bf16.mxu0 0
        %529 = vmatpush1.bf16.xpose.msra.mxu0 0
        %530 = vmatprep.subr.bf16.mxu0 0
        %531 = vmatpush1.bf16.xpose.msra.mxu0 0
        %532 = vmatprep.subr.bf16.mxu0 0
        %533 = vmatpush1.bf16.xpose.msra.mxu0 0
        %534 = vmatprep.subr.bf16.mxu0 0
        %535 = vmatpush1.bf16.xpose.msra.mxu0 0
        %536 = vmatprep.subr.bf16.mxu0 0
        %537 = vmatpush1.bf16.xpose.msra.mxu0 0
        %538 = vmatprep.subr.bf16.mxu0 0
        %539 = vmatpush1.bf16.xpose.msra.mxu0 0
        %540 = vmatprep.subr.bf16.mxu0 0
        %541 = vmatpush1.bf16.xpose.msra.mxu0 0
        %542 = vmatprep.subr.bf16.mxu0 0
        %543 = vmatpush1.bf16.xpose.msra.mxu0 0
        %544 = vmatprep.mubr.bf16.mxu0 0
        %545 = vmatmul.mubr.bf16.gmra.mrb[0].mxu0 %v510
        %v546 = vpop.f32.mrb[0].mxu0
        %v547 = vadd.f32 0.0, %v546
        %v548 = vpop.f32.mrb[0].mxu0
        %v549 = vpop.f32.mrb[0].mxu0
        %v550 = vpop.f32.mrb[0].mxu0
        %551 = vdwg.mxu0
        %v552 = vpack.c.bf16 %v443, %v443
        %v553 = vpack.c.bf16 %v547, %v547
        %vm554 = vcmask 64512
        %v556 = vsel %vm554, %v552, 0
        %vm558 = vcmask 1043456
        %v560 = vsel %vm558, %v553, 0
        %562 = vmatprep.subr.bf16.mxu0 0
        %563 = vmatpush1.bf16.msra.mxu0 %v560
        %564 = vmatprep.subr.bf16.mxu0 0
        %565 = vmatpush1.bf16.msra.mxu0 0
        %566 = vmatprep.subr.bf16.mxu0 0
        %567 = vmatpush1.bf16.msra.mxu0 0
        %568 = vmatprep.subr.bf16.mxu0 0
        %569 = vmatpush1.bf16.msra.mxu0 0
        %570 = vmatprep.subr.bf16.mxu0 0
        %571 = vmatpush1.bf16.msra.mxu0 0
        %572 = vmatprep.subr.bf16.mxu0 0
        %573 = vmatpush1.bf16.msra.mxu0 0
        %574 = vmatprep.subr.bf16.mxu0 0
        %575 = vmatpush1.bf16.msra.mxu0 0
        %576 = vmatprep.subr.bf16.mxu0 0
        %577 = vmatpush1.bf16.msra.mxu0 0
        %578 = vmatprep.subr.bf16.mxu0 0
        %579 = vmatpush1.bf16.msra.mxu0 0
        %580 = vmatprep.subr.bf16.mxu0 0
        %581 = vmatpush1.bf16.msra.mxu0 0
        %582 = vmatprep.subr.bf16.mxu0 0
        %583 = vmatpush1.bf16.msra.mxu0 0
        %584 = vmatprep.subr.bf16.mxu0 0
        %585 = vmatpush1.bf16.msra.mxu0 0
        %586 = vmatprep.subr.bf16.mxu0 0
        %587 = vmatpush1.bf16.msra.mxu0 0
        %588 = vmatprep.subr.bf16.mxu0 0
        %589 = vmatpush1.bf16.msra.mxu0 0
        %590 = vmatprep.subr.bf16.mxu0 0
        %591 = vmatpush1.bf16.msra.mxu0 0
        %592 = vmatprep.subr.bf16.mxu0 0
        %593 = vmatpush1.bf16.msra.mxu0 0
        %594 = vmatprep.mubr.bf16.mxu0 0
        %595 = vmatmul.mubr.bf16.gmra.mrb[0].mxu0 %v556
        %v596 = vpop.f32.mrb[0].mxu0
        %v597 = vadd.f32 0.0, %v596
        %v598 = vpop.f32.mrb[0].mxu0
        %v599 = vpop.f32.mrb[0].mxu0
        %v600 = vpop.f32.mrb[0].mxu0
        %601 = vdwg.mxu0
        %v602 = vsel %vm554, %v597, -inf
        %603 = vmax.xlane.f32.xlu0 %v602
        %v604 = vpop.xlane.xlu0 %603
        %v605 = vsub.f32 %v597, %v604
        %v606 = vmul.f32 %v605, 1.442695
        %v607 = vpow.pop %v606
        %v608 = vsel %vm554, %v607, 0.0
        %609 = vadd.xlane.f32.xlu0 %v608
        %v610 = vpop.xlane.xlu0 %609
        %v611 = vrcp.pop %v610
        %v612 = vmul.f32 %v607, %v611
        %v613 = vpack.c.bf16 %v612, %v612
        %v614 = vpack.c.bf16 %v503, %v503
        %v616 = vsel %vm554, %v613, 0
        %v619 = vsel %vm558, %v614, 0
        %621 = vmatprep.subr.bf16.mxu0 0
        %622 = vmatpush1.bf16.msra.mxu0 %v619
        %623 = vmatprep.subr.bf16.mxu0 0
        %624 = vmatpush1.bf16.msra.mxu0 0
        %625 = vmatprep.subr.bf16.mxu0 0
        %626 = vmatpush1.bf16.msra.mxu0 0
        %627 = vmatprep.subr.bf16.mxu0 0
        %628 = vmatpush1.bf16.msra.mxu0 0
        %629 = vmatprep.subr.bf16.mxu0 0
        %630 = vmatpush1.bf16.msra.mxu0 0
        %631 = vmatprep.subr.bf16.mxu0 0
        %632 = vmatpush1.bf16.msra.mxu0 0
        %633 = vmatprep.subr.bf16.mxu0 0
        %634 = vmatpush1.bf16.msra.mxu0 0
        %635 = vmatprep.subr.bf16.mxu0 0
        %636 = vmatpush1.bf16.msra.mxu0 0
        %637 = vmatprep.subr.bf16.mxu0 0
        %638 = vmatpush1.bf16.msra.mxu0 0
        %639 = vmatprep.subr.bf16.mxu0 0
        %640 = vmatpush1.bf16.msra.mxu0 0
        %641 = vmatprep.subr.bf16.mxu0 0
        %642 = vmatpush1.bf16.msra.mxu0 0
        %643 = vmatprep.subr.bf16.mxu0 0
        %644 = vmatpush1.bf16.msra.mxu0 0
        %645 = vmatprep.subr.bf16.mxu0 0
        %646 = vmatpush1.bf16.msra.mxu0 0
        %647 = vmatprep.subr.bf16.mxu0 0
        %648 = vmatpush1.bf16.msra.mxu0 0
        %649 = vmatprep.subr.bf16.mxu0 0
        %650 = vmatpush1.bf16.msra.mxu0 0
        %651 = vmatprep.subr.bf16.mxu0 0
        %652 = vmatpush1.bf16.msra.mxu0 0
        %653 = vmatprep.mubr.bf16.mxu0 0
        %654 = vmatmul.mubr.bf16.gmra.mrb[0].mxu0 %v616
        %v655 = vpop.f32.mrb[0].mxu0
        %v656 = vadd.f32 0.0, %v655
        %v657 = vpop.f32.mrb[0].mxu0
        %v658 = vpop.f32.mrb[0].mxu0
        %v659 = vpop.f32.mrb[0].mxu0
        %660 = vdwg.mxu0
        %v661 = vpack.c.bf16 %v656, %v656
        %v662 = vld [vmem:[%s4] sm:$0xf]
        %s663 = scalar_lea.vmem %s5, 2
        %v664 = vld [vmem:[%s663] sm:$0x3]
        %s665 = scalar_lea.vmem %s1, 16
        %v666 = vld [vmem:[%s665] sm:$0xf]
        %v667 = vld [vmem:[%s665 + $0x4] sm:$0xf]
        %v668 = vld [vmem:[%s665 + $0x8] sm:$0xf]
        %v669 = vld [vmem:[%s665 + $0xc] sm:$0xf]
        %v670 = vlaneseq
        %v671 = vshrl.u32 %v670, 7
        %v672 = vsub.s32 0, %v671
        %v673 = vrot.slane %v664, %v672
        %v678 = vunpack.c.l.b16 %v666
        %v679 = vunpack.c.l.b16 %v667
        %v680 = vunpack.c.l.b16 %v668
        %v681 = vunpack.c.l.b16 %v669
        %v682 = vpack.c.b16 %v679, %v678
        %v683 = vpack.c.b16 %v681, %v680
        %686 = vmatprep.subr.bf16.mxu0 0
        %687 = vmatpush1.bf16.msra.mxu0 %v682
        %688 = vmatprep.subr.bf16.mxu0 0
        %689 = vmatpush1.bf16.msra.mxu0 %v683
        %690 = vmatprep.subr.bf16.mxu0 0
        %691 = vmatpush1.bf16.msra.mxu0 0
        %692 = vmatprep.subr.bf16.mxu0 0
        %693 = vmatpush1.bf16.msra.mxu0 0
        %694 = vmatprep.subr.bf16.mxu0 0
        %695 = vmatpush1.bf16.msra.mxu0 0
        %696 = vmatprep.subr.bf16.mxu0 0
        %697 = vmatpush1.bf16.msra.mxu0 0
        %698 = vmatprep.subr.bf16.mxu0 0
        %699 = vmatpush1.bf16.msra.mxu0 0
        %700 = vmatprep.subr.bf16.mxu0 0
        %701 = vmatpush1.bf16.msra.mxu0 0
        %702 = vmatprep.subr.bf16.mxu0 0
        %703 = vmatpush1.bf16.msra.mxu0 0
        %704 = vmatprep.subr.bf16.mxu0 0
        %705 = vmatpush1.bf16.msra.mxu0 0
        %706 = vmatprep.subr.bf16.mxu0 0
        %707 = vmatpush1.bf16.msra.mxu0 0
        %708 = vmatprep.subr.bf16.mxu0 0
        %709 = vmatpush1.bf16.msra.mxu0 0
        %710 = vmatprep.subr.bf16.mxu0 0
        %711 = vmatpush1.bf16.msra.mxu0 0
        %712 = vmatprep.subr.bf16.mxu0 0
        %713 = vmatpush1.bf16.msra.mxu0 0
        %714 = vmatprep.subr.bf16.mxu0 0
        %715 = vmatpush1.bf16.msra.mxu0 0
        %716 = vmatprep.subr.bf16.mxu0 0
        %717 = vmatpush1.bf16.msra.mxu0 0
        %718 = vmatprep.mubr.bf16.mxu0 0
        %719 = vmatmul.mubr.bf16.gmra.mrb[0].mxu0 %v406
        %v720 = vpop.f32.mrb[0].mxu0
        %v721 = vadd.f32 %v673, %v720
        %v722 = vpop.f32.mrb[0].mxu0
        %v723 = vpop.f32.mrb[0].mxu0
        %v724 = vpop.f32.mrb[0].mxu0
        %725 = vdwg.mxu0
        %s726 = scalar_lea.vmem %s3, 16
        %v727 = vld [vmem:[%s726] sm:$0xf]
        %v728 = vld [vmem:[%s726 + $0x4] sm:$0xf]
        %v729 = vld [vmem:[%s726 + $0x8] sm:$0xf]
        %v730 = vld [vmem:[%s726 + $0xc] sm:$0xf]
        %v731 = vlaneseq
        %v732 = vshrl.u32 %v731, 7
        %v733 = vsub.s32 1, %v732
        %v734 = vrot.slane %v664, %v733
        %v739 = vunpack.c.l.b16 %v727
        %v740 = vunpack.c.l.b16 %v728
        %v741 = vunpack.c.l.b16 %v729
        %v742 = vunpack.c.l.b16 %v730
        %v743 = vpack.c.b16 %v740, %v739
        %v744 = vpack.c.b16 %v742, %v741
        %747 = vmatprep.subr.bf16.mxu0 0
        %748 = vmatpush1.bf16.msra.mxu0 %v743
        %749 = vmatprep.subr.bf16.mxu0 0
        %750 = vmatpush1.bf16.msra.mxu0 %v744
        %751 = vmatprep.subr.bf16.mxu0 0
        %752 = vmatpush1.bf16.msra.mxu0 0
        %753 = vmatprep.subr.bf16.mxu0 0
        %754 = vmatpush1.bf16.msra.mxu0 0
        %755 = vmatprep.subr.bf16.mxu0 0
        %756 = vmatpush1.bf16.msra.mxu0 0
        %757 = vmatprep.subr.bf16.mxu0 0
        %758 = vmatpush1.bf16.msra.mxu0 0
        %759 = vmatprep.subr.bf16.mxu0 0
        %760 = vmatpush1.bf16.msra.mxu0 0
        %761 = vmatprep.subr.bf16.mxu0 0
        %762 = vmatpush1.bf16.msra.mxu0 0
        %763 = vmatprep.subr.bf16.mxu0 0
        %764 = vmatpush1.bf16.msra.mxu0 0
        %765 = vmatprep.subr.bf16.mxu0 0
        %766 = vmatpush1.bf16.msra.mxu0 0
        %767 = vmatprep.subr.bf16.mxu0 0
        %768 = vmatpush1.bf16.msra.mxu0 0
        %769 = vmatprep.subr.bf16.mxu0 0
        %770 = vmatpush1.bf16.msra.mxu0 0
        %771 = vmatprep.subr.bf16.mxu0 0
        %772 = vmatpush1.bf16.msra.mxu0 0
        %773 = vmatprep.subr.bf16.mxu0 0
        %774 = vmatpush1.bf16.msra.mxu0 0
        %775 = vmatprep.subr.bf16.mxu0 0
        %776 = vmatpush1.bf16.msra.mxu0 0
        %777 = vmatprep.subr.bf16.mxu0 0
        %778 = vmatpush1.bf16.msra.mxu0 0
        %779 = vmatprep.mubr.bf16.mxu0 0
        %780 = vmatmul.mubr.bf16.gmra.mrb[0].mxu0 %v406
        %v781 = vpop.f32.mrb[0].mxu0
        %v782 = vadd.f32 %v734, %v781
        %v783 = vpop.f32.mrb[0].mxu0
        %v784 = vpop.f32.mrb[0].mxu0
        %v785 = vpop.f32.mrb[0].mxu0
        %786 = vdwg.mxu0
        %s787 = scalar_lea.vmem %s2, 4
        %v788 = vld [vmem:[%s787] sm:$0xf]
        %v790 = vsel %vm358, %v788, 0
        %792 = vmatprep.subr.bf16.mxu0 0
        %793 = vmatpush1.bf16.xpose.msra.mxu0 %v406
        %794 = vmatprep.subr.bf16.mxu0 0
        %795 = vmatpush1.bf16.xpose.msra.mxu0 0
        %796 = vmatprep.subr.bf16.mxu0 0
        %797 = vmatpush1.bf16.xpose.msra.mxu0 0
        %798 = vmatprep.subr.bf16.mxu0 0
        %799 = vmatpush1.bf16.xpose.msra.mxu0 0
        %800 = vmatprep.subr.bf16.mxu0 0
        %801 = vmatpush1.bf16.xpose.msra.mxu0 0
        %802 = vmatprep.subr.bf16.mxu0 0
        %803 = vmatpush1.bf16.xpose.msra.mxu0 0
        %804 = vmatprep.subr.bf16.mxu0 0
        %805 = vmatpush1.bf16.xpose.msra.mxu0 0
        %806 = vmatprep.subr.bf16.mxu0 0
        %807 = vmatpush1.bf16.xpose.msra.mxu0 0
        %808 = vmatprep.subr.bf16.mxu0 0
        %809 = vmatpush1.bf16.xpose.msra.mxu0 0
        %810 = vmatprep.subr.bf16.mxu0 0
        %811 = vmatpush1.bf16.xpose.msra.mxu0 0
        %812 = vmatprep.subr.bf16.mxu0 0
        %813 = vmatpush1.bf16.xpose.msra.mxu0 0
        %814 = vmatprep.subr.bf16.mxu0 0
        %815 = vmatpush1.bf16.xpose.msra.mxu0 0
        %816 = vmatprep.subr.bf16.mxu0 0
        %817 = vmatpush1.bf16.xpose.msra.mxu0 0
        %818 = vmatprep.subr.bf16.mxu0 0
        %819 = vmatpush1.bf16.xpose.msra.mxu0 0
        %820 = vmatprep.subr.bf16.mxu0 0
        %821 = vmatpush1.bf16.xpose.msra.mxu0 0
        %822 = vmatprep.subr.bf16.mxu0 0
        %823 = vmatpush1.bf16.xpose.msra.mxu0 0
        %824 = vmatprep.mubr.bf16.mxu0 0
        %825 = vmatmul.mubr.bf16.gmra.mrb[0].mxu0 %v790
        %v826 = vpop.f32.mrb[0].mxu0
        %v827 = vadd.f32 0.0, %v826
        %v828 = vpop.f32.mrb[0].mxu0
        %v829 = vpop.f32.mrb[0].mxu0
        %v830 = vpop.f32.mrb[0].mxu0
        %831 = vdwg.mxu0
        %v832 = vpack.c.bf16 %v721, %v721
        %v833 = vpack.c.bf16 %v827, %v827
        %v835 = vsel %vm554, %v832, 0
        %v838 = vsel %vm558, %v833, 0
        %840 = vmatprep.subr.bf16.mxu0 0
        %841 = vmatpush1.bf16.msra.mxu0 %v838
        %842 = vmatprep.subr.bf16.mxu0 0
        %843 = vmatpush1.bf16.msra.mxu0 0
        %844 = vmatprep.subr.bf16.mxu0 0
        %845 = vmatpush1.bf16.msra.mxu0 0
        %846 = vmatprep.subr.bf16.mxu0 0
        %847 = vmatpush1.bf16.msra.mxu0 0
        %848 = vmatprep.subr.bf16.mxu0 0
        %849 = vmatpush1.bf16.msra.mxu0 0
        %850 = vmatprep.subr.bf16.mxu0 0
        %851 = vmatpush1.bf16.msra.mxu0 0
        %852 = vmatprep.subr.bf16.mxu0 0
        %853 = vmatpush1.bf16.msra.mxu0 0
        %854 = vmatprep.subr.bf16.mxu0 0
        %855 = vmatpush1.bf16.msra.mxu0 0
        %856 = vmatprep.subr.bf16.mxu0 0
        %857 = vmatpush1.bf16.msra.mxu0 0
        %858 = vmatprep.subr.bf16.mxu0 0
        %859 = vmatpush1.bf16.msra.mxu0 0
        %860 = vmatprep.subr.bf16.mxu0 0
        %861 = vmatpush1.bf16.msra.mxu0 0
        %862 = vmatprep.subr.bf16.mxu0 0
        %863 = vmatpush1.bf16.msra.mxu0 0
        %864 = vmatprep.subr.bf16.mxu0 0
        %865 = vmatpush1.bf16.msra.mxu0 0
        %866 = vmatprep.subr.bf16.mxu0 0
        %867 = vmatpush1.bf16.msra.mxu0 0
        %868 = vmatprep.subr.bf16.mxu0 0
        %869 = vmatpush1.bf16.msra.mxu0 0
        %870 = vmatprep.subr.bf16.mxu0 0
        %871 = vmatpush1.bf16.msra.mxu0 0
        %872 = vmatprep.mubr.bf16.mxu0 0
        %873 = vmatmul.mubr.bf16.gmra.mrb[0].mxu0 %v835
        %v874 = vpop.f32.mrb[0].mxu0
        %v875 = vadd.f32 0.0, %v874
        %v876 = vpop.f32.mrb[0].mxu0
        %v877 = vpop.f32.mrb[0].mxu0
        %v878 = vpop.f32.mrb[0].mxu0
        %879 = vdwg.mxu0
        %v880 = vsel %vm554, %v875, -inf
        %881 = vmax.xlane.f32.xlu0 %v880
        %v882 = vpop.xlane.xlu0 %881
        %v883 = vsub.f32 %v875, %v882
        %v884 = vmul.f32 %v883, 1.442695
        %v885 = vpow.pop %v884
        %v886 = vsel %vm554, %v885, 0.0
        %887 = vadd.xlane.f32.xlu0 %v886
        %v888 = vpop.xlane.xlu0 %887
        %v889 = vrcp.pop %v888
        %v890 = vmul.f32 %v885, %v889
        %v891 = vpack.c.bf16 %v890, %v890
        %v892 = vpack.c.bf16 %v782, %v782
        %v894 = vsel %vm554, %v891, 0
        %v897 = vsel %vm558, %v892, 0
        %899 = vmatprep.subr.bf16.mxu0 0
        %900 = vmatpush1.bf16.msra.mxu0 %v897
        %901 = vmatprep.subr.bf16.mxu0 0
        %902 = vmatpush1.bf16.msra.mxu0 0
        %903 = vmatprep.subr.bf16.mxu0 0
        %904 = vmatpush1.bf16.msra.mxu0 0
        %905 = vmatprep.subr.bf16.mxu0 0
        %906 = vmatpush1.bf16.msra.mxu0 0
        %907 = vmatprep.subr.bf16.mxu0 0
        %908 = vmatpush1.bf16.msra.mxu0 0
        %909 = vmatprep.subr.bf16.mxu0 0
        %910 = vmatpush1.bf16.msra.mxu0 0
        %911 = vmatprep.subr.bf16.mxu0 0
        %912 = vmatpush1.bf16.msra.mxu0 0
        %913 = vmatprep.subr.bf16.mxu0 0
        %914 = vmatpush1.bf16.msra.mxu0 0
        %915 = vmatprep.subr.bf16.mxu0 0
        %916 = vmatpush1.bf16.msra.mxu0 0
        %917 = vmatprep.subr.bf16.mxu0 0
        %918 = vmatpush1.bf16.msra.mxu0 0
        %919 = vmatprep.subr.bf16.mxu0 0
        %920 = vmatpush1.bf16.msra.mxu0 0
        %921 = vmatprep.subr.bf16.mxu0 0
        %922 = vmatpush1.bf16.msra.mxu0 0
        %923 = vmatprep.subr.bf16.mxu0 0
        %924 = vmatpush1.bf16.msra.mxu0 0
        %925 = vmatprep.subr.bf16.mxu0 0
        %926 = vmatpush1.bf16.msra.mxu0 0
        %927 = vmatprep.subr.bf16.mxu0 0
        %928 = vmatpush1.bf16.msra.mxu0 0
        %929 = vmatprep.subr.bf16.mxu0 0
        %930 = vmatpush1.bf16.msra.mxu0 0
        %931 = vmatprep.mubr.bf16.mxu0 0
        %932 = vmatmul.mubr.bf16.gmra.mrb[0].mxu0 %v894
        %v933 = vpop.f32.mrb[0].mxu0
        %v934 = vadd.f32 0.0, %v933
        %v935 = vpop.f32.mrb[0].mxu0
        %v936 = vpop.f32.mrb[0].mxu0
        %v937 = vpop.f32.mrb[0].mxu0
        %938 = vdwg.mxu0
        %v939 = vpack.c.bf16 %v934, %v934
        %s940 = scalar_lea.vmem %s4, 4
        %v941 = vld [vmem:[%s940] sm:$0xf]
        %v943 = vsel %vm554, %v939, 0
        %v946 = vsel %vm558, %v941, 0
        %948 = vmatprep.subr.bf16.mxu0 0
        %949 = vmatpush1.bf16.msra.mxu0 %v946
        %950 = vmatprep.subr.bf16.mxu0 0
        %951 = vmatpush1.bf16.msra.mxu0 0
        %952 = vmatprep.subr.bf16.mxu0 0
        %953 = vmatpush1.bf16.msra.mxu0 0
        %954 = vmatprep.subr.bf16.mxu0 0
        %955 = vmatpush1.bf16.msra.mxu0 0
        %956 = vmatprep.subr.bf16.mxu0 0
        %957 = vmatpush1.bf16.msra.mxu0 0
        %958 = vmatprep.subr.bf16.mxu0 0
        %959 = vmatpush1.bf16.msra.mxu0 0
        %960 = vmatprep.subr.bf16.mxu0 0
        %961 = vmatpush1.bf16.msra.mxu0 0
        %962 = vmatprep.subr.bf16.mxu0 0
        %963 = vmatpush1.bf16.msra.mxu0 0
        %964 = vmatprep.subr.bf16.mxu0 0
        %965 = vmatpush1.bf16.msra.mxu0 0
        %966 = vmatprep.subr.bf16.mxu0 0
        %967 = vmatpush1.bf16.msra.mxu0 0
        %968 = vmatprep.subr.bf16.mxu0 0
        %969 = vmatpush1.bf16.msra.mxu0 0
        %970 = vmatprep.subr.bf16.mxu0 0
        %971 = vmatpush1.bf16.msra.mxu0 0
        %972 = vmatprep.subr.bf16.mxu0 0
        %973 = vmatpush1.bf16.msra.mxu0 0
        %974 = vmatprep.subr.bf16.mxu0 0
        %975 = vmatpush1.bf16.msra.mxu0 0
        %976 = vmatprep.subr.bf16.mxu0 0
        %977 = vmatpush1.bf16.msra.mxu0 0
        %978 = vmatprep.subr.bf16.mxu0 0
        %979 = vmatpush1.bf16.msra.mxu0 0
        %980 = vmatprep.mubr.bf16.mxu0 0
        %981 = vmatmul.mubr.bf16.gmra.mrb[0].mxu0 %v943
        %v982 = vpop.f32.mrb[0].mxu0
        %v983 = vadd.f32 0.0, %v982
        %v984 = vpop.f32.mrb[0].mxu0
        %v985 = vpop.f32.mrb[0].mxu0
        %v986 = vpop.f32.mrb[0].mxu0
        %987 = vdwg.mxu0
        %v989 = vsel %vm554, %v661, 0
        %v992 = vsel %vm558, %v662, 0
        %994 = vmatprep.subr.bf16.mxu0 0
        %995 = vmatpush1.bf16.msra.mxu0 %v992
        %996 = vmatprep.subr.bf16.mxu0 0
        %997 = vmatpush1.bf16.msra.mxu0 0
        %998 = vmatprep.subr.bf16.mxu0 0
        %999 = vmatpush1.bf16.msra.mxu0 0
        %1000 = vmatprep.subr.bf16.mxu0 0
        %1001 = vmatpush1.bf16.msra.mxu0 0
        %1002 = vmatprep.subr.bf16.mxu0 0
        %1003 = vmatpush1.bf16.msra.mxu0 0
        %1004 = vmatprep.subr.bf16.mxu0 0
        %1005 = vmatpush1.bf16.msra.mxu0 0
        %1006 = vmatprep.subr.bf16.mxu0 0
        %1007 = vmatpush1.bf16.msra.mxu0 0
        %1008 = vmatprep.subr.bf16.mxu0 0
        %1009 = vmatpush1.bf16.msra.mxu0 0
        %1010 = vmatprep.subr.bf16.mxu0 0
        %1011 = vmatpush1.bf16.msra.mxu0 0
        %1012 = vmatprep.subr.bf16.mxu0 0
        %1013 = vmatpush1.bf16.msra.mxu0 0
        %1014 = vmatprep.subr.bf16.mxu0 0
        %1015 = vmatpush1.bf16.msra.mxu0 0
        %1016 = vmatprep.subr.bf16.mxu0 0
        %1017 = vmatpush1.bf16.msra.mxu0 0
        %1018 = vmatprep.subr.bf16.mxu0 0
        %1019 = vmatpush1.bf16.msra.mxu0 0
        %1020 = vmatprep.subr.bf16.mxu0 0
        %1021 = vmatpush1.bf16.msra.mxu0 0
        %1022 = vmatprep.subr.bf16.mxu0 0
        %1023 = vmatpush1.bf16.msra.mxu0 0
        %1024 = vmatprep.subr.bf16.mxu0 0
        %1025 = vmatpush1.bf16.msra.mxu0 0
        %1026 = vmatprep.mubr.bf16.mxu0 0
        %1027 = vmatmul.mubr.bf16.gmra.mrb[0].mxu0 %v989
        %v1028 = vpop.f32.mrb[0].mxu0
        %v1029 = vadd.f32 %v983, %v1028
        %v1030 = vpop.f32.mrb[0].mxu0
        %v1031 = vpop.f32.mrb[0].mxu0
        %v1032 = vpop.f32.mrb[0].mxu0
        %1033 = vdwg.mxu0
        %s1034 = scalar_lea.vmem %s5, 4
        %v1035 = vld [vmem:[%s1034] sm:$0x3]
        %s1036 = scalar_lea.vmem %s1, 32
        %v1037 = vld [vmem:[%s1036] sm:$0xf]
        %v1038 = vld [vmem:[%s1036 + $0x4] sm:$0xf]
        %v1039 = vld [vmem:[%s1036 + $0x8] sm:$0xf]
        %v1040 = vld [vmem:[%s1036 + $0xc] sm:$0xf]
        %v1041 = vlaneseq
        %v1042 = vshrl.u32 %v1041, 7
        %v1043 = vsub.s32 0, %v1042
        %v1044 = vrot.slane %v1035, %v1043
        %v1049 = vunpack.c.l.b16 %v1037
        %v1050 = vunpack.c.l.b16 %v1038
        %v1051 = vunpack.c.l.b16 %v1039
        %v1052 = vunpack.c.l.b16 %v1040
        %v1053 = vpack.c.b16 %v1050, %v1049
        %v1054 = vpack.c.b16 %v1052, %v1051
        %1057 = vmatprep.subr.bf16.mxu0 0
        %1058 = vmatpush1.bf16.msra.mxu0 %v1053
        %1059 = vmatprep.subr.bf16.mxu0 0
        %1060 = vmatpush1.bf16.msra.mxu0 %v1054
        %1061 = vmatprep.subr.bf16.mxu0 0
        %1062 = vmatpush1.bf16.msra.mxu0 0
        %1063 = vmatprep.subr.bf16.mxu0 0
        %1064 = vmatpush1.bf16.msra.mxu0 0
        %1065 = vmatprep.subr.bf16.mxu0 0
        %1066 = vmatpush1.bf16.msra.mxu0 0
        %1067 = vmatprep.subr.bf16.mxu0 0
        %1068 = vmatpush1.bf16.msra.mxu0 0
        %1069 = vmatprep.subr.bf16.mxu0 0
        %1070 = vmatpush1.bf16.msra.mxu0 0
        %1071 = vmatprep.subr.bf16.mxu0 0
        %1072 = vmatpush1.bf16.msra.mxu0 0
        %1073 = vmatprep.subr.bf16.mxu0 0
        %1074 = vmatpush1.bf16.msra.mxu0 0
        %1075 = vmatprep.subr.bf16.mxu0 0
        %1076 = vmatpush1.bf16.msra.mxu0 0
        %1077 = vmatprep.subr.bf16.mxu0 0
        %1078 = vmatpush1.bf16.msra.mxu0 0
        %1079 = vmatprep.subr.bf16.mxu0 0
        %1080 = vmatpush1.bf16.msra.mxu0 0
        %1081 = vmatprep.subr.bf16.mxu0 0
        %1082 = vmatpush1.bf16.msra.mxu0 0
        %1083 = vmatprep.subr.bf16.mxu0 0
        %1084 = vmatpush1.bf16.msra.mxu0 0
        %1085 = vmatprep.subr.bf16.mxu0 0
        %1086 = vmatpush1.bf16.msra.mxu0 0
        %1087 = vmatprep.subr.bf16.mxu0 0
        %1088 = vmatpush1.bf16.msra.mxu0 0
        %1089 = vmatprep.mubr.bf16.mxu0 0
        %1090 = vmatmul.mubr.bf16.gmra.mrb[0].mxu0 %v406
        %v1091 = vpop.f32.mrb[0].mxu0
        %v1092 = vadd.f32 %v1044, %v1091
        %v1093 = vpop.f32.mrb[0].mxu0
        %v1094 = vpop.f32.mrb[0].mxu0
        %v1095 = vpop.f32.mrb[0].mxu0
        %1096 = vdwg.mxu0
        %s1097 = scalar_lea.vmem %s3, 32
        %v1098 = vld [vmem:[%s1097] sm:$0xf]
        %v1099 = vld [vmem:[%s1097 + $0x4] sm:$0xf]
        %v1100 = vld [vmem:[%s1097 + $0x8] sm:$0xf]
        %v1101 = vld [vmem:[%s1097 + $0xc] sm:$0xf]
        %v1102 = vlaneseq
        %v1103 = vshrl.u32 %v1102, 7
        %v1104 = vsub.s32 1, %v1103
        %v1105 = vrot.slane %v1035, %v1104
        %v1110 = vunpack.c.l.b16 %v1098
        %v1111 = vunpack.c.l.b16 %v1099
        %v1112 = vunpack.c.l.b16 %v1100
        %v1113 = vunpack.c.l.b16 %v1101
        %v1114 = vpack.c.b16 %v1111, %v1110
        %v1115 = vpack.c.b16 %v1113, %v1112
        %1118 = vmatprep.subr.bf16.mxu0 0
        %1119 = vmatpush1.bf16.msra.mxu0 %v1114
        %1120 = vmatprep.subr.bf16.mxu0 0
        %1121 = vmatpush1.bf16.msra.mxu0 %v1115
        %1122 = vmatprep.subr.bf16.mxu0 0
        %1123 = vmatpush1.bf16.msra.mxu0 0
        %1124 = vmatprep.subr.bf16.mxu0 0
        %1125 = vmatpush1.bf16.msra.mxu0 0
        %1126 = vmatprep.subr.bf16.mxu0 0
        %1127 = vmatpush1.bf16.msra.mxu0 0
        %1128 = vmatprep.subr.bf16.mxu0 0
        %1129 = vmatpush1.bf16.msra.mxu0 0
        %1130 = vmatprep.subr.bf16.mxu0 0
        %1131 = vmatpush1.bf16.msra.mxu0 0
        %1132 = vmatprep.subr.bf16.mxu0 0
        %1133 = vmatpush1.bf16.msra.mxu0 0
        %1134 = vmatprep.subr.bf16.mxu0 0
        %1135 = vmatpush1.bf16.msra.mxu0 0
        %1136 = vmatprep.subr.bf16.mxu0 0
        %1137 = vmatpush1.bf16.msra.mxu0 0
        %1138 = vmatprep.subr.bf16.mxu0 0
        %1139 = vmatpush1.bf16.msra.mxu0 0
        %1140 = vmatprep.subr.bf16.mxu0 0
        %1141 = vmatpush1.bf16.msra.mxu0 0
        %1142 = vmatprep.subr.bf16.mxu0 0
        %1143 = vmatpush1.bf16.msra.mxu0 0
        %1144 = vmatprep.subr.bf16.mxu0 0
        %1145 = vmatpush1.bf16.msra.mxu0 0
        %1146 = vmatprep.subr.bf16.mxu0 0
        %1147 = vmatpush1.bf16.msra.mxu0 0
        %1148 = vmatprep.subr.bf16.mxu0 0
        %1149 = vmatpush1.bf16.msra.mxu0 0
        %1150 = vmatprep.mubr.bf16.mxu0 0
        %1151 = vmatmul.mubr.bf16.gmra.mrb[0].mxu0 %v406
        %v1152 = vpop.f32.mrb[0].mxu0
        %v1153 = vadd.f32 %v1105, %v1152
        %v1154 = vpop.f32.mrb[0].mxu0
        %v1155 = vpop.f32.mrb[0].mxu0
        %v1156 = vpop.f32.mrb[0].mxu0
        %1157 = vdwg.mxu0
        %s1158 = scalar_lea.vmem %s2, 8
        %v1159 = vld [vmem:[%s1158] sm:$0xf]
        %v1161 = vsel %vm358, %v1159, 0
        %1163 = vmatprep.subr.bf16.mxu0 0
        %1164 = vmatpush1.bf16.xpose.msra.mxu0 %v406
        %1165 = vmatprep.subr.bf16.mxu0 0
        %1166 = vmatpush1.bf16.xpose.msra.mxu0 0
        %1167 = vmatprep.subr.bf16.mxu0 0
        %1168 = vmatpush1.bf16.xpose.msra.mxu0 0
        %1169 = vmatprep.subr.bf16.mxu0 0
        %1170 = vmatpush1.bf16.xpose.msra.mxu0 0
        %1171 = vmatprep.subr.bf16.mxu0 0
        %1172 = vmatpush1.bf16.xpose.msra.mxu0 0
        %1173 = vmatprep.subr.bf16.mxu0 0
        %1174 = vmatpush1.bf16.xpose.msra.mxu0 0
        %1175 = vmatprep.subr.bf16.mxu0 0
        %1176 = vmatpush1.bf16.xpose.msra.mxu0 0
        %1177 = vmatprep.subr.bf16.mxu0 0
        %1178 = vmatpush1.bf16.xpose.msra.mxu0 0
        %1179 = vmatprep.subr.bf16.mxu0 0
        %1180 = vmatpush1.bf16.xpose.msra.mxu0 0
        %1181 = vmatprep.subr.bf16.mxu0 0
        %1182 = vmatpush1.bf16.xpose.msra.mxu0 0
        %1183 = vmatprep.subr.bf16.mxu0 0
        %1184 = vmatpush1.bf16.xpose.msra.mxu0 0
        %1185 = vmatprep.subr.bf16.mxu0 0
        %1186 = vmatpush1.bf16.xpose.msra.mxu0 0
        %1187 = vmatprep.subr.bf16.mxu0 0
        %1188 = vmatpush1.bf16.xpose.msra.mxu0 0
        %1189 = vmatprep.subr.bf16.mxu0 0
        %1190 = vmatpush1.bf16.xpose.msra.mxu0 0
        %1191 = vmatprep.subr.bf16.mxu0 0
        %1192 = vmatpush1.bf16.xpose.msra.mxu0 0
        %1193 = vmatprep.subr.bf16.mxu0 0
        %1194 = vmatpush1.bf16.xpose.msra.mxu0 0
        %1195 = vmatprep.mubr.bf16.mxu0 0
        %1196 = vmatmul.mubr.bf16.gmra.mrb[0].mxu0 %v1161
        %v1197 = vpop.f32.mrb[0].mxu0
        %v1198 = vadd.f32 0.0, %v1197
        %v1199 = vpop.f32.mrb[0].mxu0
        %v1200 = vpop.f32.mrb[0].mxu0
        %v1201 = vpop.f32.mrb[0].mxu0
        %1202 = vdwg.mxu0
        %v1203 = vpack.c.bf16 %v1092, %v1092
        %v1204 = vpack.c.bf16 %v1198, %v1198
        %v1206 = vsel %vm554, %v1203, 0
        %v1209 = vsel %vm558, %v1204, 0
        %1211 = vmatprep.subr.bf16.mxu0 0
        %1212 = vmatpush1.bf16.msra.mxu0 %v1209
        %1213 = vmatprep.subr.bf16.mxu0 0
        %1214 = vmatpush1.bf16.msra.mxu0 0
        %1215 = vmatprep.subr.bf16.mxu0 0
        %1216 = vmatpush1.bf16.msra.mxu0 0
        %1217 = vmatprep.subr.bf16.mxu0 0
        %1218 = vmatpush1.bf16.msra.mxu0 0
        %1219 = vmatprep.subr.bf16.mxu0 0
        %1220 = vmatpush1.bf16.msra.mxu0 0
        %1221 = vmatprep.subr.bf16.mxu0 0
        %1222 = vmatpush1.bf16.msra.mxu0 0
        %1223 = vmatprep.subr.bf16.mxu0 0
        %1224 = vmatpush1.bf16.msra.mxu0 0
        %1225 = vmatprep.subr.bf16.mxu0 0
        %1226 = vmatpush1.bf16.msra.mxu0 0
        %1227 = vmatprep.subr.bf16.mxu0 0
        %1228 = vmatpush1.bf16.msra.mxu0 0
        %1229 = vmatprep.subr.bf16.mxu0 0
        %1230 = vmatpush1.bf16.msra.mxu0 0
        %1231 = vmatprep.subr.bf16.mxu0 0
        %1232 = vmatpush1.bf16.msra.mxu0 0
        %1233 = vmatprep.subr.bf16.mxu0 0
        %1234 = vmatpush1.bf16.msra.mxu0 0
        %1235 = vmatprep.subr.bf16.mxu0 0
        %1236 = vmatpush1.bf16.msra.mxu0 0
        %1237 = vmatprep.subr.bf16.mxu0 0
        %1238 = vmatpush1.bf16.msra.mxu0 0
        %1239 = vmatprep.subr.bf16.mxu0 0
        %1240 = vmatpush1.bf16.msra.mxu0 0
        %1241 = vmatprep.subr.bf16.mxu0 0
        %1242 = vmatpush1.bf16.msra.mxu0 0
        %1243 = vmatprep.mubr.bf16.mxu0 0
        %1244 = vmatmul.mubr.bf16.gmra.mrb[0].mxu0 %v1206
        %v1245 = vpop.f32.mrb[0].mxu0
        %v1246 = vadd.f32 0.0, %v1245
        %v1247 = vpop.f32.mrb[0].mxu0
        %v1248 = vpop.f32.mrb[0].mxu0
        %v1249 = vpop.f32.mrb[0].mxu0
        %1250 = vdwg.mxu0
        %v1251 = vsel %vm554, %v1246, -inf
        %1252 = vmax.xlane.f32.xlu0 %v1251
        %v1253 = vpop.xlane.xlu0 %1252
        %v1254 = vsub.f32 %v1246, %v1253
        %v1255 = vmul.f32 %v1254, 1.442695
        %v1256 = vpow.pop %v1255
        %v1257 = vsel %vm554, %v1256, 0.0
        %1258 = vadd.xlane.f32.xlu0 %v1257
        %v1259 = vpop.xlane.xlu0 %1258
        %v1260 = vrcp.pop %v1259
        %v1261 = vmul.f32 %v1256, %v1260
        %v1262 = vpack.c.bf16 %v1261, %v1261
        %v1263 = vpack.c.bf16 %v1153, %v1153
        %v1265 = vsel %vm554, %v1262, 0
        %v1268 = vsel %vm558, %v1263, 0
        %1270 = vmatprep.subr.bf16.mxu0 0
        %1271 = vmatpush1.bf16.msra.mxu0 %v1268
        %1272 = vmatprep.subr.bf16.mxu0 0
        %1273 = vmatpush1.bf16.msra.mxu0 0
        %1274 = vmatprep.subr.bf16.mxu0 0
        %1275 = vmatpush1.bf16.msra.mxu0 0
        %1276 = vmatprep.subr.bf16.mxu0 0
        %1277 = vmatpush1.bf16.msra.mxu0 0
        %1278 = vmatprep.subr.bf16.mxu0 0
        %1279 = vmatpush1.bf16.msra.mxu0 0
        %1280 = vmatprep.subr.bf16.mxu0 0
        %1281 = vmatpush1.bf16.msra.mxu0 0
        %1282 = vmatprep.subr.bf16.mxu0 0
        %1283 = vmatpush1.bf16.msra.mxu0 0
        %1284 = vmatprep.subr.bf16.mxu0 0
        %1285 = vmatpush1.bf16.msra.mxu0 0
        %1286 = vmatprep.subr.bf16.mxu0 0
        %1287 = vmatpush1.bf16.msra.mxu0 0
        %1288 = vmatprep.subr.bf16.mxu0 0
        %1289 = vmatpush1.bf16.msra.mxu0 0
        %1290 = vmatprep.subr.bf16.mxu0 0
        %1291 = vmatpush1.bf16.msra.mxu0 0
        %1292 = vmatprep.subr.bf16.mxu0 0
        %1293 = vmatpush1.bf16.msra.mxu0 0
        %1294 = vmatprep.subr.bf16.mxu0 0
        %1295 = vmatpush1.bf16.msra.mxu0 0
        %1296 = vmatprep.subr.bf16.mxu0 0
        %1297 = vmatpush1.bf16.msra.mxu0 0
        %1298 = vmatprep.subr.bf16.mxu0 0
        %1299 = vmatpush1.bf16.msra.mxu0 0
        %1300 = vmatprep.subr.bf16.mxu0 0
        %1301 = vmatpush1.bf16.msra.mxu0 0
        %1302 = vmatprep.mubr.bf16.mxu0 0
        %1303 = vmatmul.mubr.bf16.gmra.mrb[0].mxu0 %v1265
        %v1304 = vpop.f32.mrb[0].mxu0
        %v1305 = vadd.f32 0.0, %v1304
        %v1306 = vpop.f32.mrb[0].mxu0
        %v1307 = vpop.f32.mrb[0].mxu0
        %v1308 = vpop.f32.mrb[0].mxu0
        %1309 = vdwg.mxu0
        %v1310 = vpack.c.bf16 %v1305, %v1305
        %s1311 = scalar_lea.vmem %s4, 8
        %v1312 = vld [vmem:[%s1311] sm:$0xf]
        %v1314 = vsel %vm554, %v1310, 0
        %v1317 = vsel %vm558, %v1312, 0
        %1319 = vmatprep.subr.bf16.mxu0 0
        %1320 = vmatpush1.bf16.msra.mxu0 %v1317
        %1321 = vmatprep.subr.bf16.mxu0 0
        %1322 = vmatpush1.bf16.msra.mxu0 0
        %1323 = vmatprep.subr.bf16.mxu0 0
        %1324 = vmatpush1.bf16.msra.mxu0 0
        %1325 = vmatprep.subr.bf16.mxu0 0
        %1326 = vmatpush1.bf16.msra.mxu0 0
        %1327 = vmatprep.subr.bf16.mxu0 0
        %1328 = vmatpush1.bf16.msra.mxu0 0
        %1329 = vmatprep.subr.bf16.mxu0 0
        %1330 = vmatpush1.bf16.msra.mxu0 0
        %1331 = vmatprep.subr.bf16.mxu0 0
        %1332 = vmatpush1.bf16.msra.mxu0 0
        %1333 = vmatprep.subr.bf16.mxu0 0
        %1334 = vmatpush1.bf16.msra.mxu0 0
        %1335 = vmatprep.subr.bf16.mxu0 0
        %1336 = vmatpush1.bf16.msra.mxu0 0
        %1337 = vmatprep.subr.bf16.mxu0 0
        %1338 = vmatpush1.bf16.msra.mxu0 0
        %1339 = vmatprep.subr.bf16.mxu0 0
        %1340 = vmatpush1.bf16.msra.mxu0 0
        %1341 = vmatprep.subr.bf16.mxu0 0
        %1342 = vmatpush1.bf16.msra.mxu0 0
        %1343 = vmatprep.subr.bf16.mxu0 0
        %1344 = vmatpush1.bf16.msra.mxu0 0
        %1345 = vmatprep.subr.bf16.mxu0 0
        %1346 = vmatpush1.bf16.msra.mxu0 0
        %1347 = vmatprep.subr.bf16.mxu0 0
        %1348 = vmatpush1.bf16.msra.mxu0 0
        %1349 = vmatprep.subr.bf16.mxu0 0
        %1350 = vmatpush1.bf16.msra.mxu0 0
        %1351 = vmatprep.mubr.bf16.mxu0 0
        %1352 = vmatmul.mubr.bf16.gmra.mrb[0].mxu0 %v1314
        %v1353 = vpop.f32.mrb[0].mxu0
        %v1354 = vadd.f32 0.0, %v1353
        %v1355 = vpop.f32.mrb[0].mxu0
        %v1356 = vpop.f32.mrb[0].mxu0
        %v1357 = vpop.f32.mrb[0].mxu0
        %1358 = vdwg.mxu0
        %v1359 = vadd.f32 %v1029, %v1354
        %s1360 = scalar_lea.vmem %s5, 6
        %v1361 = vld [vmem:[%s1360] sm:$0x3]
        %s1362 = scalar_lea.vmem %s1, 48
        %v1363 = vld [vmem:[%s1362] sm:$0xf]
        %v1364 = vld [vmem:[%s1362 + $0x4] sm:$0xf]
        %v1365 = vld [vmem:[%s1362 + $0x8] sm:$0xf]
        %v1366 = vld [vmem:[%s1362 + $0xc] sm:$0xf]
        %v1367 = vlaneseq
        %v1368 = vshrl.u32 %v1367, 7
        %v1369 = vsub.s32 0, %v1368
        %v1370 = vrot.slane %v1361, %v1369
        %v1375 = vunpack.c.l.b16 %v1363
        %v1376 = vunpack.c.l.b16 %v1364
        %v1377 = vunpack.c.l.b16 %v1365
        %v1378 = vunpack.c.l.b16 %v1366
        %v1379 = vpack.c.b16 %v1376, %v1375
        %v1380 = vpack.c.b16 %v1378, %v1377
        %1383 = vmatprep.subr.bf16.mxu0 0
        %1384 = vmatpush1.bf16.msra.mxu0 %v1379
        %1385 = vmatprep.subr.bf16.mxu0 0
        %1386 = vmatpush1.bf16.msra.mxu0 %v1380
        %1387 = vmatprep.subr.bf16.mxu0 0
        %1388 = vmatpush1.bf16.msra.mxu0 0
        %1389 = vmatprep.subr.bf16.mxu0 0
        %1390 = vmatpush1.bf16.msra.mxu0 0
        %1391 = vmatprep.subr.bf16.mxu0 0
        %1392 = vmatpush1.bf16.msra.mxu0 0
        %1393 = vmatprep.subr.bf16.mxu0 0
        %1394 = vmatpush1.bf16.msra.mxu0 0
        %1395 = vmatprep.subr.bf16.mxu0 0
        %1396 = vmatpush1.bf16.msra.mxu0 0
        %1397 = vmatprep.subr.bf16.mxu0 0
        %1398 = vmatpush1.bf16.msra.mxu0 0
        %1399 = vmatprep.subr.bf16.mxu0 0
        %1400 = vmatpush1.bf16.msra.mxu0 0
        %1401 = vmatprep.subr.bf16.mxu0 0
        %1402 = vmatpush1.bf16.msra.mxu0 0
        %1403 = vmatprep.subr.bf16.mxu0 0
        %1404 = vmatpush1.bf16.msra.mxu0 0
        %1405 = vmatprep.subr.bf16.mxu0 0
        %1406 = vmatpush1.bf16.msra.mxu0 0
        %1407 = vmatprep.subr.bf16.mxu0 0
        %1408 = vmatpush1.bf16.msra.mxu0 0
        %1409 = vmatprep.subr.bf16.mxu0 0
        %1410 = vmatpush1.bf16.msra.mxu0 0
        %1411 = vmatprep.subr.bf16.mxu0 0
        %1412 = vmatpush1.bf16.msra.mxu0 0
        %1413 = vmatprep.subr.bf16.mxu0 0
        %1414 = vmatpush1.bf16.msra.mxu0 0
        %1415 = vmatprep.mubr.bf16.mxu0 0
        %1416 = vmatmul.mubr.bf16.gmra.mrb[0].mxu0 %v406
        %v1417 = vpop.f32.mrb[0].mxu0
        %v1418 = vadd.f32 %v1370, %v1417
        %v1419 = vpop.f32.mrb[0].mxu0
        %v1420 = vpop.f32.mrb[0].mxu0
        %v1421 = vpop.f32.mrb[0].mxu0
        %1422 = vdwg.mxu0
        %s1423 = scalar_lea.vmem %s3, 48
        %v1424 = vld [vmem:[%s1423] sm:$0xf]
        %v1425 = vld [vmem:[%s1423 + $0x4] sm:$0xf]
        %v1426 = vld [vmem:[%s1423 + $0x8] sm:$0xf]
        %v1427 = vld [vmem:[%s1423 + $0xc] sm:$0xf]
        %v1428 = vlaneseq
        %v1429 = vshrl.u32 %v1428, 7
        %v1430 = vsub.s32 1, %v1429
        %v1431 = vrot.slane %v1361, %v1430
        %v1436 = vunpack.c.l.b16 %v1424
        %v1437 = vunpack.c.l.b16 %v1425
        %v1438 = vunpack.c.l.b16 %v1426
        %v1439 = vunpack.c.l.b16 %v1427
        %v1440 = vpack.c.b16 %v1437, %v1436
        %v1441 = vpack.c.b16 %v1439, %v1438
        %1444 = vmatprep.subr.bf16.mxu0 0
        %1445 = vmatpush1.bf16.msra.mxu0 %v1440
        %1446 = vmatprep.subr.bf16.mxu0 0
        %1447 = vmatpush1.bf16.msra.mxu0 %v1441
        %1448 = vmatprep.subr.bf16.mxu0 0
        %1449 = vmatpush1.bf16.msra.mxu0 0
        %1450 = vmatprep.subr.bf16.mxu0 0
        %1451 = vmatpush1.bf16.msra.mxu0 0
        %1452 = vmatprep.subr.bf16.mxu0 0
        %1453 = vmatpush1.bf16.msra.mxu0 0
        %1454 = vmatprep.subr.bf16.mxu0 0
        %1455 = vmatpush1.bf16.msra.mxu0 0
        %1456 = vmatprep.subr.bf16.mxu0 0
        %1457 = vmatpush1.bf16.msra.mxu0 0
        %1458 = vmatprep.subr.bf16.mxu0 0
        %1459 = vmatpush1.bf16.msra.mxu0 0
        %1460 = vmatprep.subr.bf16.mxu0 0
        %1461 = vmatpush1.bf16.msra.mxu0 0
        %1462 = vmatprep.subr.bf16.mxu0 0
        %1463 = vmatpush1.bf16.msra.mxu0 0
        %1464 = vmatprep.subr.bf16.mxu0 0
        %1465 = vmatpush1.bf16.msra.mxu0 0
        %1466 = vmatprep.subr.bf16.mxu0 0
        %1467 = vmatpush1.bf16.msra.mxu0 0
        %1468 = vmatprep.subr.bf16.mxu0 0
        %1469 = vmatpush1.bf16.msra.mxu0 0
        %1470 = vmatprep.subr.bf16.mxu0 0
        %1471 = vmatpush1.bf16.msra.mxu0 0
        %1472 = vmatprep.subr.bf16.mxu0 0
        %1473 = vmatpush1.bf16.msra.mxu0 0
        %1474 = vmatprep.subr.bf16.mxu0 0
        %1475 = vmatpush1.bf16.msra.mxu0 0
        %1476 = vmatprep.mubr.bf16.mxu0 0
        %1477 = vmatmul.mubr.bf16.gmra.mrb[0].mxu0 %v406
        %v1478 = vpop.f32.mrb[0].mxu0
        %v1479 = vadd.f32 %v1431, %v1478
        %v1480 = vpop.f32.mrb[0].mxu0
        %v1481 = vpop.f32.mrb[0].mxu0
        %v1482 = vpop.f32.mrb[0].mxu0
        %1483 = vdwg.mxu0
        %s1484 = scalar_lea.vmem %s2, 12
        %v1485 = vld [vmem:[%s1484] sm:$0xf]
        %v1487 = vsel %vm358, %v1485, 0
        %1489 = vmatprep.subr.bf16.mxu0 0
        %1490 = vmatpush1.bf16.xpose.msra.mxu0 %v406
        %1491 = vmatprep.subr.bf16.mxu0 0
        %1492 = vmatpush1.bf16.xpose.msra.mxu0 0
        %1493 = vmatprep.subr.bf16.mxu0 0
        %1494 = vmatpush1.bf16.xpose.msra.mxu0 0
        %1495 = vmatprep.subr.bf16.mxu0 0
        %1496 = vmatpush1.bf16.xpose.msra.mxu0 0
        %1497 = vmatprep.subr.bf16.mxu0 0
        %1498 = vmatpush1.bf16.xpose.msra.mxu0 0
        %1499 = vmatprep.subr.bf16.mxu0 0
        %1500 = vmatpush1.bf16.xpose.msra.mxu0 0
        %1501 = vmatprep.subr.bf16.mxu0 0
        %1502 = vmatpush1.bf16.xpose.msra.mxu0 0
        %1503 = vmatprep.subr.bf16.mxu0 0
        %1504 = vmatpush1.bf16.xpose.msra.mxu0 0
        %1505 = vmatprep.subr.bf16.mxu0 0
        %1506 = vmatpush1.bf16.xpose.msra.mxu0 0
        %1507 = vmatprep.subr.bf16.mxu0 0
        %1508 = vmatpush1.bf16.xpose.msra.mxu0 0
        %1509 = vmatprep.subr.bf16.mxu0 0
        %1510 = vmatpush1.bf16.xpose.msra.mxu0 0
        %1511 = vmatprep.subr.bf16.mxu0 0
        %1512 = vmatpush1.bf16.xpose.msra.mxu0 0
        %1513 = vmatprep.subr.bf16.mxu0 0
        %1514 = vmatpush1.bf16.xpose.msra.mxu0 0
        %1515 = vmatprep.subr.bf16.mxu0 0
        %1516 = vmatpush1.bf16.xpose.msra.mxu0 0
        %1517 = vmatprep.subr.bf16.mxu0 0
        %1518 = vmatpush1.bf16.xpose.msra.mxu0 0
        %1519 = vmatprep.subr.bf16.mxu0 0
        %1520 = vmatpush1.bf16.xpose.msra.mxu0 0
        %1521 = vmatprep.mubr.bf16.mxu0 0
        %1522 = vmatmul.mubr.bf16.gmra.mrb[0].mxu0 %v1487
        %v1523 = vpop.f32.mrb[0].mxu0
        %v1524 = vadd.f32 0.0, %v1523
        %v1525 = vpop.f32.mrb[0].mxu0
        %v1526 = vpop.f32.mrb[0].mxu0
        %v1527 = vpop.f32.mrb[0].mxu0
        %1528 = vdwg.mxu0
        %v1529 = vpack.c.bf16 %v1418, %v1418
        %v1530 = vpack.c.bf16 %v1524, %v1524
        %v1532 = vsel %vm554, %v1529, 0
        %v1535 = vsel %vm558, %v1530, 0
        %1537 = vmatprep.subr.bf16.mxu0 0
        %1538 = vmatpush1.bf16.msra.mxu0 %v1535
        %1539 = vmatprep.subr.bf16.mxu0 0
        %1540 = vmatpush1.bf16.msra.mxu0 0
        %1541 = vmatprep.subr.bf16.mxu0 0
        %1542 = vmatpush1.bf16.msra.mxu0 0
        %1543 = vmatprep.subr.bf16.mxu0 0
        %1544 = vmatpush1.bf16.msra.mxu0 0
        %1545 = vmatprep.subr.bf16.mxu0 0
        %1546 = vmatpush1.bf16.msra.mxu0 0
        %1547 = vmatprep.subr.bf16.mxu0 0
        %1548 = vmatpush1.bf16.msra.mxu0 0
        %1549 = vmatprep.subr.bf16.mxu0 0
        %1550 = vmatpush1.bf16.msra.mxu0 0
        %1551 = vmatprep.subr.bf16.mxu0 0
        %1552 = vmatpush1.bf16.msra.mxu0 0
        %1553 = vmatprep.subr.bf16.mxu0 0
        %1554 = vmatpush1.bf16.msra.mxu0 0
        %1555 = vmatprep.subr.bf16.mxu0 0
        %1556 = vmatpush1.bf16.msra.mxu0 0
        %1557 = vmatprep.subr.bf16.mxu0 0
        %1558 = vmatpush1.bf16.msra.mxu0 0
        %1559 = vmatprep.subr.bf16.mxu0 0
        %1560 = vmatpush1.bf16.msra.mxu0 0
        %1561 = vmatprep.subr.bf16.mxu0 0
        %1562 = vmatpush1.bf16.msra.mxu0 0
        %1563 = vmatprep.subr.bf16.mxu0 0
        %1564 = vmatpush1.bf16.msra.mxu0 0
        %1565 = vmatprep.subr.bf16.mxu0 0
        %1566 = vmatpush1.bf16.msra.mxu0 0
        %1567 = vmatprep.subr.bf16.mxu0 0
        %1568 = vmatpush1.bf16.msra.mxu0 0
        %1569 = vmatprep.mubr.bf16.mxu0 0
        %1570 = vmatmul.mubr.bf16.gmra.mrb[0].mxu0 %v1532
        %v1571 = vpop.f32.mrb[0].mxu0
        %v1572 = vadd.f32 0.0, %v1571
        %v1573 = vpop.f32.mrb[0].mxu0
        %v1574 = vpop.f32.mrb[0].mxu0
        %v1575 = vpop.f32.mrb[0].mxu0
        %1576 = vdwg.mxu0
        %v1577 = vsel %vm554, %v1572, -inf
        %1578 = vmax.xlane.f32.xlu0 %v1577
        %v1579 = vpop.xlane.xlu0 %1578
        %v1580 = vsub.f32 %v1572, %v1579
        %v1581 = vmul.f32 %v1580, 1.442695
        %v1582 = vpow.pop %v1581
        %v1583 = vsel %vm554, %v1582, 0.0
        %1584 = vadd.xlane.f32.xlu0 %v1583
        %v1585 = vpop.xlane.xlu0 %1584
        %v1586 = vrcp.pop %v1585
        %v1587 = vmul.f32 %v1582, %v1586
        %v1588 = vpack.c.bf16 %v1587, %v1587
        %v1589 = vpack.c.bf16 %v1479, %v1479
        %v1591 = vsel %vm554, %v1588, 0
        %v1594 = vsel %vm558, %v1589, 0
        %1596 = vmatprep.subr.bf16.mxu0 0
        %1597 = vmatpush1.bf16.msra.mxu0 %v1594
        %1598 = vmatprep.subr.bf16.mxu0 0
        %1599 = vmatpush1.bf16.msra.mxu0 0
        %1600 = vmatprep.subr.bf16.mxu0 0
        %1601 = vmatpush1.bf16.msra.mxu0 0
        %1602 = vmatprep.subr.bf16.mxu0 0
        %1603 = vmatpush1.bf16.msra.mxu0 0
        %1604 = vmatprep.subr.bf16.mxu0 0
        %1605 = vmatpush1.bf16.msra.mxu0 0
        %1606 = vmatprep.subr.bf16.mxu0 0
        %1607 = vmatpush1.bf16.msra.mxu0 0
        %1608 = vmatprep.subr.bf16.mxu0 0
        %1609 = vmatpush1.bf16.msra.mxu0 0
        %1610 = vmatprep.subr.bf16.mxu0 0
        %1611 = vmatpush1.bf16.msra.mxu0 0
        %1612 = vmatprep.subr.bf16.mxu0 0
        %1613 = vmatpush1.bf16.msra.mxu0 0
        %1614 = vmatprep.subr.bf16.mxu0 0
        %1615 = vmatpush1.bf16.msra.mxu0 0
        %1616 = vmatprep.subr.bf16.mxu0 0
        %1617 = vmatpush1.bf16.msra.mxu0 0
        %1618 = vmatprep.subr.bf16.mxu0 0
        %1619 = vmatpush1.bf16.msra.mxu0 0
        %1620 = vmatprep.subr.bf16.mxu0 0
        %1621 = vmatpush1.bf16.msra.mxu0 0
        %1622 = vmatprep.subr.bf16.mxu0 0
        %1623 = vmatpush1.bf16.msra.mxu0 0
        %1624 = vmatprep.subr.bf16.mxu0 0
        %1625 = vmatpush1.bf16.msra.mxu0 0
        %1626 = vmatprep.subr.bf16.mxu0 0
        %1627 = vmatpush1.bf16.msra.mxu0 0
        %1628 = vmatprep.mubr.bf16.mxu0 0
        %1629 = vmatmul.mubr.bf16.gmra.mrb[0].mxu0 %v1591
        %v1630 = vpop.f32.mrb[0].mxu0
        %v1631 = vadd.f32 0.0, %v1630
        %v1632 = vpop.f32.mrb[0].mxu0
        %v1633 = vpop.f32.mrb[0].mxu0
        %v1634 = vpop.f32.mrb[0].mxu0
        %1635 = vdwg.mxu0
        %v1636 = vpack.c.bf16 %v1631, %v1631
        %s1637 = scalar_lea.vmem %s4, 12
        %v1638 = vld [vmem:[%s1637] sm:$0xf]
        %v1640 = vsel %vm554, %v1636, 0
        %v1643 = vsel %vm558, %v1638, 0
        %1645 = vmatprep.subr.bf16.mxu0 0
        %1646 = vmatpush1.bf16.msra.mxu0 %v1643
        %1647 = vmatprep.subr.bf16.mxu0 0
        %1648 = vmatpush1.bf16.msra.mxu0 0
        %1649 = vmatprep.subr.bf16.mxu0 0
        %1650 = vmatpush1.bf16.msra.mxu0 0
        %1651 = vmatprep.subr.bf16.mxu0 0
        %1652 = vmatpush1.bf16.msra.mxu0 0
        %1653 = vmatprep.subr.bf16.mxu0 0
        %1654 = vmatpush1.bf16.msra.mxu0 0
        %1655 = vmatprep.subr.bf16.mxu0 0
        %1656 = vmatpush1.bf16.msra.mxu0 0
        %1657 = vmatprep.subr.bf16.mxu0 0
        %1658 = vmatpush1.bf16.msra.mxu0 0
        %1659 = vmatprep.subr.bf16.mxu0 0
        %1660 = vmatpush1.bf16.msra.mxu0 0
        %1661 = vmatprep.subr.bf16.mxu0 0
        %1662 = vmatpush1.bf16.msra.mxu0 0
        %1663 = vmatprep.subr.bf16.mxu0 0
        %1664 = vmatpush1.bf16.msra.mxu0 0
        %1665 = vmatprep.subr.bf16.mxu0 0
        %1666 = vmatpush1.bf16.msra.mxu0 0
        %1667 = vmatprep.subr.bf16.mxu0 0
        %1668 = vmatpush1.bf16.msra.mxu0 0
        %1669 = vmatprep.subr.bf16.mxu0 0
        %1670 = vmatpush1.bf16.msra.mxu0 0
        %1671 = vmatprep.subr.bf16.mxu0 0
        %1672 = vmatpush1.bf16.msra.mxu0 0
        %1673 = vmatprep.subr.bf16.mxu0 0
        %1674 = vmatpush1.bf16.msra.mxu0 0
        %1675 = vmatprep.subr.bf16.mxu0 0
        %1676 = vmatpush1.bf16.msra.mxu0 0
        %1677 = vmatprep.mubr.bf16.mxu0 0
        %1678 = vmatmul.mubr.bf16.gmra.mrb[0].mxu0 %v1640
        %v1679 = vpop.f32.mrb[0].mxu0
        %v1680 = vadd.f32 0.0, %v1679
        %v1681 = vpop.f32.mrb[0].mxu0
        %v1682 = vpop.f32.mrb[0].mxu0
        %v1683 = vpop.f32.mrb[0].mxu0
        %1684 = vdwg.mxu0
        %v1685 = vadd.f32 %v1359, %v1680
        %v1686 = vadd.f32 %v356, %v1685
        %v1687 = vlaneseq
        %v1688 = vshrl.u32 %v1687, 7
        %v1689 = vsub.s32 4, %v1688
        %v1690 = vrot.slane %v357, %v1689
        %v1691 = vadd.f32 %v1686, %v1690
        %v1692 = vsel %vm358, %v1691, 0.0
        %1693 = vadd.xlane.f32.xlu0 %v1692
        %v1694 = vpop.xlane.xlu0 %1693
        %v1695 = vmul.f32 %v1694, %v362
        %v1696 = vsub.f32 %v1691, %v1695
        %v1697 = vmul.f32 %v1696, %v1696
        %v1698 = vsel %vm358, %v1697, 0.0
        %1699 = vadd.xlane.f32.xlu0 %v1698
        %v1700 = vpop.xlane.xlu0 %1699
        %v1701 = vmul.f32 %v1700, %v362
        %v1702 = vadd.f32 %v1701, 1e-05
        %v1703 = vrsqrt.pop %v1702
        %v1704 = vmul.f32 %v1696, %v1703
        %v1705 = vlaneseq
        %v1706 = vshrl.u32 %v1705, 7
        %v1707 = vsub.s32 2, %v1706
        %v1708 = vrot.slane %v357, %v1707
        %v1709 = vmul.f32 %v1704, %v1708
        %v1710 = vlaneseq
        %v1711 = vshrl.u32 %v1710, 7
        %v1712 = vsub.s32 3, %v1711
        %v1713 = vrot.slane %v357, %v1712
        %v1714 = vadd.f32 %v1709, %v1713
        %v1715 = vpack.c.bf16 %v1714, %v1714
        %v1716 = vld [vmem:[%s6] sm:$0xf]
        %v1717 = vld [vmem:[%s6 + $0x4] sm:$0xf]
        %v1718 = vld [vmem:[%s6 + $0x8] sm:$0xf]
        %v1719 = vld [vmem:[%s6 + $0xc] sm:$0xf]
        %v1720 = vld [vmem:[%s8] sm:$0x1]
        %v1722 = vlaneseq
        %v1723 = vshrl.u32 %v1722, 7
        %v1724 = vsub.s32 0, %v1723
        %v1725 = vrot.slane %v1720, %v1724
        %v1731 = vunpack.c.l.b16 %v1716
        %v1732 = vunpack.c.l.b16 %v1717
        %v1733 = vunpack.c.l.b16 %v1718
        %v1734 = vunpack.c.l.b16 %v1719
        %v1735 = vpack.c.b16 %v1732, %v1731
        %v1736 = vpack.c.b16 %v1734, %v1733
        %v1740 = vsel %vm358, %v1715, 0
        %1742 = vmatprep.subr.bf16.mxu0 0
        %1743 = vmatpush1.bf16.msra.mxu0 %v1735
        %1744 = vmatprep.subr.bf16.mxu0 0
        %1745 = vmatpush1.bf16.msra.mxu0 %v1736
        %1746 = vmatprep.subr.bf16.mxu0 0
        %1747 = vmatpush1.bf16.msra.mxu0 0
        %1748 = vmatprep.subr.bf16.mxu0 0
        %1749 = vmatpush1.bf16.msra.mxu0 0
        %1750 = vmatprep.subr.bf16.mxu0 0
        %1751 = vmatpush1.bf16.msra.mxu0 0
        %1752 = vmatprep.subr.bf16.mxu0 0
        %1753 = vmatpush1.bf16.msra.mxu0 0
        %1754 = vmatprep.subr.bf16.mxu0 0
        %1755 = vmatpush1.bf16.msra.mxu0 0
        %1756 = vmatprep.subr.bf16.mxu0 0
        %1757 = vmatpush1.bf16.msra.mxu0 0
        %1758 = vmatprep.subr.bf16.mxu0 0
        %1759 = vmatpush1.bf16.msra.mxu0 0
        %1760 = vmatprep.subr.bf16.mxu0 0
        %1761 = vmatpush1.bf16.msra.mxu0 0
        %1762 = vmatprep.subr.bf16.mxu0 0
        %1763 = vmatpush1.bf16.msra.mxu0 0
        %1764 = vmatprep.subr.bf16.mxu0 0
        %1765 = vmatpush1.bf16.msra.mxu0 0
        %1766 = vmatprep.subr.bf16.mxu0 0
        %1767 = vmatpush1.bf16.msra.mxu0 0
        %1768 = vmatprep.subr.bf16.mxu0 0
        %1769 = vmatpush1.bf16.msra.mxu0 0
        %1770 = vmatprep.subr.bf16.mxu0 0
        %1771 = vmatpush1.bf16.msra.mxu0 0
        %1772 = vmatprep.subr.bf16.mxu0 0
        %1773 = vmatpush1.bf16.msra.mxu0 0
        %1774 = vmatprep.mubr.bf16.mxu0 0
        %1775 = vmatmul.mubr.bf16.gmra.mrb[0].mxu0 %v1740
        %v1776 = vpop.f32.mrb[0].mxu0
        %v1777 = vadd.f32 %v1725, %v1776
        %v1778 = vpop.f32.mrb[0].mxu0
        %v1779 = vpop.f32.mrb[0].mxu0
        %v1780 = vpop.f32.mrb[0].mxu0
        %1781 = vdwg.mxu0
        %v1782 = vmul.f32 %v1777, 0.5
        %v1783 = vrcp.pop 1.4142135
        %v1784 = vmul.f32 %v1777, %v1783
        %v1785 = verf.f32.pop %v1784
        %v1786 = vadd.f32 %v1785, 1.0
        %v1787 = vmul.f32 %v1782, %v1786
        %v1788 = vpack.c.bf16 %v1787, %v1787
        %v1789 = vld [vmem:[%s7] sm:$0xf]
        %v1790 = vld [vmem:[%s7 + $0x4] sm:$0xf]
        %v1791 = vld [vmem:[%s7 + $0x8] sm:$0xf]
        %v1792 = vld [vmem:[%s7 + $0xc] sm:$0xf]
        %v1793 = vld [vmem:[%s7 + $0x10] sm:$0xf]
        %v1794 = vld [vmem:[%s7 + $0x14] sm:$0xf]
        %v1795 = vld [vmem:[%s7 + $0x18] sm:$0xf]
        %v1796 = vld [vmem:[%s7 + $0x1c] sm:$0xf]
        %v1797 = vld [vmem:[%s7 + $0x20] sm:$0xf]
        %v1798 = vld [vmem:[%s7 + $0x24] sm:$0xf]
        %v1799 = vld [vmem:[%s7 + $0x28] sm:$0xf]
        %v1800 = vld [vmem:[%s7 + $0x2c] sm:$0xf]
        %v1801 = vld [vmem:[%s7 + $0x30] sm:$0xf]
        %v1802 = vld [vmem:[%s7 + $0x34] sm:$0xf]
        %v1803 = vld [vmem:[%s7 + $0x38] sm:$0xf]
        %v1804 = vld [vmem:[%s7 + $0x3c] sm:$0xf]
        %v1805 = vlaneseq
        %v1806 = vshrl.u32 %v1805, 7
        %v1807 = vsub.s32 5, %v1806
        %v1808 = vrot.slane %v357, %v1807
        %v1825 = vunpack.c.l.b16 %v1789
        %v1826 = vunpack.c.l.b16 %v1790
        %v1827 = vunpack.c.l.b16 %v1791
        %v1828 = vunpack.c.l.b16 %v1792
        %v1829 = vunpack.c.l.b16 %v1793
        %v1830 = vunpack.c.l.b16 %v1794
        %v1831 = vunpack.c.l.b16 %v1795
        %v1832 = vunpack.c.l.b16 %v1796
        %v1833 = vunpack.c.l.b16 %v1797
        %v1834 = vunpack.c.l.b16 %v1798
        %v1835 = vunpack.c.l.b16 %v1799
        %v1836 = vunpack.c.l.b16 %v1800
        %v1837 = vunpack.c.l.b16 %v1801
        %v1838 = vunpack.c.l.b16 %v1802
        %v1839 = vunpack.c.l.b16 %v1803
        %v1840 = vunpack.c.l.b16 %v1804
        %v1841 = vpack.c.b16 %v1826, %v1825
        %v1842 = vpack.c.b16 %v1828, %v1827
        %v1843 = vpack.c.b16 %v1830, %v1829
        %v1844 = vpack.c.b16 %v1832, %v1831
        %v1845 = vpack.c.b16 %v1834, %v1833
        %v1846 = vpack.c.b16 %v1836, %v1835
        %v1847 = vpack.c.b16 %v1838, %v1837
        %v1848 = vpack.c.b16 %v1840, %v1839
        %1857 = vmatprep.subr.bf16.mxu0 0
        %1858 = vmatpush1.bf16.msra.mxu0 %v1841
        %1859 = vmatprep.subr.bf16.mxu0 0
        %1860 = vmatpush1.bf16.msra.mxu0 %v1842
        %1861 = vmatprep.subr.bf16.mxu0 0
        %1862 = vmatpush1.bf16.msra.mxu0 %v1843
        %1863 = vmatprep.subr.bf16.mxu0 0
        %1864 = vmatpush1.bf16.msra.mxu0 %v1844
        %1865 = vmatprep.subr.bf16.mxu0 0
        %1866 = vmatpush1.bf16.msra.mxu0 %v1845
        %1867 = vmatprep.subr.bf16.mxu0 0
        %1868 = vmatpush1.bf16.msra.mxu0 %v1846
        %1869 = vmatprep.subr.bf16.mxu0 0
        %1870 = vmatpush1.bf16.msra.mxu0 %v1847
        %1871 = vmatprep.subr.bf16.mxu0 0
        %1872 = vmatpush1.bf16.msra.mxu0 %v1848
        %1873 = vmatprep.subr.bf16.mxu0 0
        %1874 = vmatpush1.bf16.msra.mxu0 0
        %1875 = vmatprep.subr.bf16.mxu0 0
        %1876 = vmatpush1.bf16.msra.mxu0 0
        %1877 = vmatprep.subr.bf16.mxu0 0
        %1878 = vmatpush1.bf16.msra.mxu0 0
        %1879 = vmatprep.subr.bf16.mxu0 0
        %1880 = vmatpush1.bf16.msra.mxu0 0
        %1881 = vmatprep.subr.bf16.mxu0 0
        %1882 = vmatpush1.bf16.msra.mxu0 0
        %1883 = vmatprep.subr.bf16.mxu0 0
        %1884 = vmatpush1.bf16.msra.mxu0 0
        %1885 = vmatprep.subr.bf16.mxu0 0
        %1886 = vmatpush1.bf16.msra.mxu0 0
        %1887 = vmatprep.subr.bf16.mxu0 0
        %1888 = vmatpush1.bf16.msra.mxu0 0
        %1889 = vmatprep.mubr.bf16.mxu0 0
        %1890 = vmatmul.mubr.bf16.gmra.mrb[0].mxu0 %v1788
        %v1891 = vpop.f32.mrb[0].mxu0
        %v1892 = vadd.f32 %v1808, %v1891
        %v1893 = vpop.f32.mrb[0].mxu0
        %v1894 = vpop.f32.mrb[0].mxu0
        %v1895 = vpop.f32.mrb[0].mxu0
        %1896 = vdwg.mxu0
        %v1897 = vadd.f32 %v1691, %v1892
        %1898 = vst.msk [vmem:[%s350] sm:$0xff] %vm358, %v1897
        %s1899 = sand.u32 %s247, 1
        %s1900 = scalar_lea.sflag [#allocation3], %s1899
        %s1901 = sand.u32 %s247, 1
        %s1902 = smul.addr %s1901, 8
        %s1903 = scalar_lea.vmem [#allocation2], %s1902
        // Predicated region
        $region61: #{tpu_custom_call.1} parent=59 // pred_check
          %p1904 = pneg %p257
        $region62: #{tpu_custom_call.1} parent=59 // pred_check_branch
          %1906 = sbr.rel (%p1904) target = $region64
        $region63: #{tpu_custom_call.1} parent=59 // pred_region
          %s1908 = ssub.s32 128, 128
          %1909 = vsyncadd %s1900, %s1908
          %s1910 = smul.addr %s24, 128
          %s1911 = scalar_lea.hbm %s10, %s1910
          %s1913 = sshll.u32 %s1903, 4
          %s1914 = int_to_ptr.vmem [resolvable:$true] %s1913
          %1916 = dma.vmem_to_hbm [thread:$0]  %s1914, 128, %s1911, %s1900
        $region64: #{tpu_custom_call.1} parent=59 // pred_fallthru
          _
      $region60: #{tpu_custom_call.1} parent=5 // pred_fallthru
        _
      %p1917 = scmp.le.s32.totalorder 2, %s19
      // Predicated region
      $region65: #{tpu_custom_call.1} parent=5 // pred_check
        %p1918 = pneg %p1917
      $region66: #{tpu_custom_call.1} parent=5 // pred_check_branch
        %1920 = sbr.rel (%p1918) target = $region68
      $region67: #{tpu_custom_call.1} parent=5 // pred_region
        %s1921 = ssub.s32 %s19, 2
        // Predicated region
        $region69: #{tpu_custom_call.1} parent=67 // pred_check
          %p1922 = pneg %p263
        $region70: #{tpu_custom_call.1} parent=67 // pred_check_branch
          %1924 = sbr.rel (%p1922) target = $region72
        $region71: #{tpu_custom_call.1} parent=67 // pred_region
          %s1925 = sand.u32 %s248, 1
          %s1926 = scalar_lea.sflag [#allocation3], %s1925
          %s1927 = sand.u32 %s248, 1
          %s1928 = smul.addr %s1927, 8
          %s1929 = scalar_lea.vmem [#allocation2], %s1928
          %1930 = dma.done %s1926, 128
        $region72: #{tpu_custom_call.1} parent=67 // pred_fallthru
          _
      $region68: #{tpu_custom_call.1} parent=5 // pred_fallthru
        _
    $region6: #{tpu_custom_call.1} parent=1 // loop_footer
      %s23 = sadd.s32 1, %s19
    $region7: #{tpu_custom_call.1} parent=1 // loop_footer_branch
      %18 = sbr.rel target = $region3
    $region8: #{tpu_custom_call.1} parent=1 // loop_exit
      _
    %1931 = vsyncpa [#allocation3], 1
    %s1932 = scalar_lea.sflag [#allocation3], 1
    %1933 = vsyncpa %s1932, 1

</llo_original>
